<compile_context>
chip_gen: v7x
topology: tpu7x:2x2x1
jax: 0.10.0
libtpu: 0.0.40
codegen_flags: <defaults>
</compile_context>

<pallas_src>
import functools

import jax
import jax.numpy as jnp
from jax.experimental import pallas as pl
from jax.experimental.pallas import tpu as pltpu

LN_EPS = 1e-5     # torch.nn.LayerNorm default
ENT_EPS = 1e-10   # eps used in the PyTorch entropy (reference only)


def _transformer_kernel(*refs, num_heads, head_dim, block_b, seq_q, mem_rows):
    if mem_rows:
        (x_ref, kmem_t_ref, vmem_ref, wqkv_ref, bqkv_ref, wo_ref, bo_ref,
         g1_ref, bn1_ref, w1_ref, bf1_ref, w2_ref, bf2_ref, g2_ref, bn2_ref,
         out_ref, ent_ref, ctx_scr) = refs
    else:
        (x_ref, wqkv_ref, bqkv_ref, wo_ref, bo_ref,
         g1_ref, bn1_ref, w1_ref, bf1_ref, w2_ref, bf2_ref, g2_ref, bn2_ref,
         out_ref, ent_ref, ctx_scr) = refs
        kmem_t_ref = vmem_ref = None

    f32, bf16 = jnp.float32, jnp.bfloat16
    H, D, Bb, T, M = num_heads, head_dim, block_b, seq_q, mem_rows
    E = H * D
    N = Bb * T

    x = x_ref[...].reshape(N, E)            # f32 residual / LayerNorm path
    xb = x.astype(bf16)

    # One fused (N,E)x(E,3E) projection for Q / K_self / V_self.  The softmax
    # scale 1/sqrt(D) is already folded into the Q columns of wqkv / bqkv.
    qkv = (jnp.dot(xb, wqkv_ref[...], preferred_element_type=f32)
           + bqkv_ref[...]).astype(bf16)    # (N, 3E)

    if M:
        v_mem = vmem_ref[...]               # (M, E) bf16, shared across the batch

    ent_max = None
    # TODO(synk): for large H, switch this static unroll to
    # lax.fori_loop(..., unroll=True) with VMEM accumulators to bound live ranges.
    for h in range(H):
        lo = h * D
        qh = qkv[:, lo:lo + D]                      # (N, D) pre-scaled queries
        kh = qkv[:, E + lo:E + lo + D]              # (N, D) self keys
        vh = qkv[:, 2 * E + lo:2 * E + lo + D]      # (N, D) self values
        q3 = qh.reshape(Bb, T, D)
        k3 = kh.reshape(Bb, T, D)
        v3 = vh.reshape(Bb, T, D)

        # Scores over the per-batch self rows and (separately) the shared
        # memory rows -> no lane-dim concat needed.
        s_self = jnp.einsum("btd,bsd->bts", q3, k3,
                            preferred_element_type=f32)          # (Bb, T, T)
        m = jnp.max(s_self, axis=-1, keepdims=True)
        if M:
            s_mem = jnp.dot(qh, kmem_t_ref[h],
                            preferred_element_type=f32).reshape(Bb, T, M)
            m = jnp.maximum(m, jnp.max(s_mem, axis=-1, keepdims=True))

        sm_self = s_self - m
        e_self = jnp.exp(sm_self)
        denom = jnp.sum(e_self, axis=-1, keepdims=True)
        se_sum = jnp.sum(sm_self * e_self, axis=-1, keepdims=True)
        if M:
            sm_mem = s_mem - m
            e_mem = jnp.exp(sm_mem)
            denom = denom + jnp.sum(e_mem, axis=-1, keepdims=True)
            se_sum = se_sum + jnp.sum(sm_mem * e_mem, axis=-1, keepdims=True)

        # Attention entropy, algebraic form (no log over the score tensor):
        #   H = -sum p log p = log(denom) - sum((s-m)*e)/denom
        # exact divide/log on the tiny (Bb,T,1) tensors -> stable retention ranking.
        ent_h = jnp.log(denom) - se_sum / denom                  # (Bb, T, 1)
        ent_max = ent_h if ent_max is None else jnp.maximum(ent_max, ent_h)

        inv = pl.reciprocal(denom, approx=True)                  # EUP slot
        ctx = jnp.einsum("bts,bsd->btd", (e_self * inv).astype(bf16), v3,
                         preferred_element_type=f32)             # (Bb, T, D)
        if M:
            p_mem = (e_mem * inv).astype(bf16).reshape(N, M)
            ctx = ctx + jnp.dot(p_mem, v_mem[:, lo:lo + D],
                                preferred_element_type=f32).reshape(Bb, T, D)
        # Assemble concat(ctx_heads) rows; single K=E output matmul below.
        ctx_scr[:, lo:lo + D] = ctx.reshape(N, D).astype(bf16)

    ent_ref[...] = ent_max.astype(ent_ref.dtype)

    # Single (N,E)x(E,E) output projection (K = E contraction depth).
    attn_out = jnp.dot(ctx_scr[...], wo_ref[...],
                       preferred_element_type=f32) + bo_ref[...]

    # residual + LayerNorm1 (f32)
    y = x + attn_out
    mu = jnp.mean(y, axis=-1, keepdims=True)
    var = jnp.mean((y - mu) ** 2, axis=-1, keepdims=True)
    x2 = (y - mu) * jax.lax.rsqrt(var + LN_EPS) * g1_ref[...] + bn1_ref[...]

    # feed-forward: Linear(E,4E) -> ReLU -> Linear(4E,E), bf16 matmuls / f32 accum
    # TODO(synk): tile the FF over the 4E axis (and single-buffer the constant
    # weight blocks) for very large E on v7x's 64 MiB VMEM.
    h1 = jnp.dot(x2.astype(bf16), w1_ref[...], preferred_element_type=f32) + bf1_ref[...]
    h1 = jnp.maximum(h1, 0.0)
    ff = jnp.dot(h1.astype(bf16), w2_ref[...], preferred_element_type=f32) + bf2_ref[...]

    # residual + LayerNorm2
    z = x2 + ff
    mu2 = jnp.mean(z, axis=-1, keepdims=True)
    var2 = jnp.mean((z - mu2) ** 2, axis=-1, keepdims=True)
    out = (z - mu2) * jax.lax.rsqrt(var2 + LN_EPS) * g2_ref[...] + bn2_ref[...]
    out_ref[...] = out.reshape(Bb, T, E).astype(out_ref.dtype)


def _full(shape):
    """Constant-index-map BlockSpec for a weight block resident across the grid."""
    zeros = (0,) * len(shape)
    return pl.BlockSpec(shape, lambda b: zeros)


def _pick_block_b(B, T, min_rows=256, max_rows=512):
    """Largest divisor of B with >= 2 grid steps (when B >= 2) and bounded rows."""
    limit = max(1, B // 2)        # keep >= 2 grid steps so both v7x TCs get work
    best = 1
    for cand in range(1, limit + 1):
        if B % cand:
            continue
        if cand * T > max_rows:
            break
        best = cand
        if cand * T >= min_rows:
            break
    return best


def _vmem_limit_bytes():
    # ~5/8 of physical VMEM: ~40 MiB on v7x (64 MiB), ~80 MiB on v5e/v6e (128 MiB).
    try:
        cap = int(pltpu.get_tpu_info().vmem_capacity_bytes)
    except Exception:
        cap = 64 * 1024 * 1024
    return cap * 5 // 8


def transformer_layer_pallas(x, mem_x, p, *, block_b=None):
    B, T, E = x.shape
    H = p["num_heads"]
    D = E // H
    assert H * D == E
    if block_b is None:
        block_b = _pick_block_b(B, T)
    assert B % block_b == 0

    bf16, f32 = jnp.bfloat16, jnp.float32
    scale = 1.0 / (D ** 0.5)

    # Fused QKV weight (E, 3E) = [Wq^T*scale | Wk^T | Wv^T]; scale folded into Q.
    wqkv = jnp.concatenate([p["wq"].T * scale, p["wk"].T, p["wv"].T],
                           axis=1).astype(bf16)
    bqkv = jnp.concatenate([p["bq"] * scale, p["bk"], p["bv"]]
                           ).reshape(1, 3 * E).astype(f32)
    wo_t = p["wo"].T.astype(bf16)
    w1t = p["w1"].T.astype(bf16)          # (E, 4E)
    w2t = p["w2"].T.astype(bf16)          # (4E, E)

    mem_rows = 0 if mem_x is None else mem_x.shape[0]
    mem_args, mem_specs = (), ()
    if mem_rows:
        # Shared memory-prefix K/V projected once in plain JAX, shipped bf16;
        # K pre-transposed per head -> clean MXU matmuls, no B-fold HBM broadcast.
        k_mem = mem_x.astype(f32) @ p["wk"].T + p["bk"]                    # (M, E)
        v_mem = (mem_x.astype(f32) @ p["wv"].T + p["bv"]).astype(bf16)     # (M, E)
        k_mem_t = k_mem.reshape(mem_rows, H, D).transpose(1, 2, 0).astype(bf16)
        mem_args = (k_mem_t, v_mem)
        mem_specs = (_full((H, D, mem_rows)), _full((mem_rows, E)))

    kernel = functools.partial(_transformer_kernel, num_heads=H, head_dim=D,
                               block_b=block_b, seq_q=T, mem_rows=mem_rows)

    in_specs = [pl.BlockSpec((block_b, T, E), lambda b: (b, 0, 0))]   # x
    in_specs += list(mem_specs)                                       # k_mem_t, v_mem
    in_specs += [
        _full((E, 3 * E)), _full((1, 3 * E)),     # wqkv, bqkv
        _full((E, E)), _full((1, E)),             # wo_t, bo
        _full((1, E)), _full((1, E)),             # norm1 gamma/beta
        _full((E, 4 * E)), _full((1, 4 * E)),     # ff w1t, bf1
        _full((4 * E, E)), _full((1, E)),         # ff w2t, bf2
        _full((1, E)), _full((1, E)),             # norm2 gamma/beta
    ]
    out_specs = (
        pl.BlockSpec((block_b, T, E), lambda b: (b, 0, 0)),   # layer output
        pl.BlockSpec((block_b, T, 1), lambda b: (b, 0, 0)),   # per-token entropy
    )

    out, ent = pl.pallas_call(
        kernel,
        out_shape=(jax.ShapeDtypeStruct((B, T, E), jnp.float32),
                   jax.ShapeDtypeStruct((B, T, 1), jnp.float32)),
        grid=(B // block_b,),
        in_specs=in_specs,
        out_specs=out_specs,
        scratch_shapes=[pltpu.VMEM((block_b * T, E), jnp.bfloat16)],  # ctx assembly
        compiler_params=pltpu.CompilerParams(
            dimension_semantics=("parallel",),     # independent batch blocks
            vmem_limit_bytes=_vmem_limit_bytes(),
        ),
    )(
        x, *mem_args,
        wqkv, bqkv,
        wo_t, p["bo"].reshape(1, E).astype(f32),
        p["g1"].reshape(1, E).astype(f32), p["bn1"].reshape(1, E).astype(f32),
        w1t, p["bf1"].reshape(1, 4 * E).astype(f32),
        w2t, p["bf2"].reshape(1, E).astype(f32),
        p["g2"].reshape(1, E).astype(f32), p["bn2"].reshape(1, E).astype(f32),
    )
    return out, ent[..., 0]   # ent: (B, T) max-over-heads attention entropy


def improved_memory_transformer_layer(x, mem_x, mem_ent, params, mem_size, mode):
    """Mirrors ImprovedMemoryTransformerLayer.forward (memory glue in plain JAX)."""
    out, ent = transformer_layer_pallas(x, mem_x, params)   # hot path in Pallas

    eps = 1e-10
    ent_tok = ent[0]                          # (T,) == ent_h[0].max(0) in PyTorch
    x_det = jax.lax.stop_gradient(x)[0]       # (T, E)

    if mem_x is None:
        mem_x_new, mem_ent_new = x_det, ent_tok
    else:
        mem_x_new = jnp.concatenate([mem_x, x_det], axis=0)
        mem_ent_new = jnp.concatenate([mem_ent, ent_tok], axis=0)

    if mem_x_new.shape[0] > mem_size:
        if mode == "entropy":
            scores = mem_ent_new
        else:
            scores = jnp.linalg.norm(mem_x_new, axis=1)
        total = scores.sum() + eps
        topv, idx = jax.lax.top_k(scores, mem_size)
        ratio = topv.sum() / total
        mem_x_new = mem_x_new[idx]
        mem_ent_new = mem_ent_new[idx]
    else:
        ratio = jnp.float32(1.0)
    return out, mem_x_new, mem_ent_new, ratio


def init_params(key, E, H):
    ks = jax.random.split(key, 10)
    s = 0.1
    return dict(
        num_heads=H,
        wq=jax.random.normal(ks[0], (E, E), jnp.float32) * s,
        wk=jax.random.normal(ks[1], (E, E), jnp.float32) * s,
        wv=jax.random.normal(ks[2], (E, E), jnp.float32) * s,
        bq=jax.random.normal(ks[3], (E,), jnp.float32) * s,
        bk=jnp.zeros((E,), jnp.float32),
        bv=jnp.zeros((E,), jnp.float32),
        wo=jax.random.normal(ks[4], (E, E), jnp.float32) * s,
        bo=jax.random.normal(ks[5], (E,), jnp.float32) * s,
        g1=jnp.ones((E,), jnp.float32), bn1=jnp.zeros((E,), jnp.float32),
        w1=jax.random.normal(ks[6], (4 * E, E), jnp.float32) * s,
        bf1=jax.random.normal(ks[7], (4 * E,), jnp.float32) * s,
        w2=jax.random.normal(ks[8], (E, 4 * E), jnp.float32) * s,
        bf2=jax.random.normal(ks[9], (E,), jnp.float32) * s,
        g2=jnp.ones((E,), jnp.float32), bn2=jnp.zeros((E,), jnp.float32),
    )


def _reference_forward(x, kv, p):
    """Pure-jnp f32 reference of the attention/norm/ff block + entropy."""
    B, T, E = x.shape
    S = kv.shape[1]
    H = p["num_heads"]
    D = E // H
    q = (x @ p["wq"].T + p["bq"]).reshape(B, T, H, D).transpose(0, 2, 1, 3)
    k = (kv @ p["wk"].T + p["bk"]).reshape(B, S, H, D).transpose(0, 2, 1, 3)
    v = (kv @ p["wv"].T + p["bv"]).reshape(B, S, H, D).transpose(0, 2, 1, 3)
    sc = jnp.einsum("bhtd,bhsd->bhts", q, k) / jnp.sqrt(jnp.float32(D))
    w = jax.nn.softmax(sc, axis=-1)
    ctx = jnp.einsum("bhts,bhsd->bhtd", w, v).transpose(0, 2, 1, 3).reshape(B, T, E)
    attn_out = ctx @ p["wo"].T + p["bo"]

    def ln(z, g, b):
        mu = z.mean(-1, keepdims=True)
        var = ((z - mu) ** 2).mean(-1, keepdims=True)
        return (z - mu) / jnp.sqrt(var + LN_EPS) * g + b

    x2 = ln(x + attn_out, p["g1"], p["bn1"])
    ff = jnp.maximum(x2 @ p["w1"].T + p["bf1"], 0.0) @ p["w2"].T + p["bf2"]
    ent = (-(w * jnp.log(w + ENT_EPS)).sum(-1)).max(axis=1)   # (B, T)
    return ln(x2 + ff, p["g2"], p["bn2"]), ent


if __name__ == "__main__":
    B, T, E, H = 2, 8, 32, 4
    M = 8            # existing memory rows
    mem_size = 12    # forces the top-k retention branch (M + T = 16 > 12)
    mode = "entropy"

    key = jax.random.PRNGKey(0)
    kx, kmem, kent, kp = jax.random.split(key, 4)
    x = jax.random.normal(kx, (B, T, E), jnp.float32)
    mem_x = jax.random.normal(kmem, (M, E), jnp.float32)
    mem_ent = jax.random.uniform(kent, (M,), jnp.float32)
    params = init_params(kp, E, H)

    # forward with memory (exercises the top-k retention branch)
    out, mem_x_new, mem_ent_new, ratio = improved_memory_transformer_layer(
        x, mem_x, mem_ent, params, mem_size, mode)
    jax.block_until_ready((out, mem_x_new, mem_ent_new, ratio))

    # forward without memory (mem_x is None path, S = T)
    out0, mem_x0, mem_ent0, ratio0 = improved_memory_transformer_layer(
        x, None, None, params, mem_size, mode)
    jax.block_until_ready((out0, mem_x0, mem_ent0, ratio0))

    # sanity check against a pure-jnp f32 reference (kernel matmuls are bf16,
    # accumulation f32 -> loose-ish tolerance)
    kv = jnp.concatenate([jnp.broadcast_to(mem_x[None], (B, M, E)), x], axis=1)
    ref_out, ref_ent = _reference_forward(x, kv, params)
    pal_out, pal_ent = transformer_layer_pallas(x, mem_x, params)
    assert jnp.max(jnp.abs(pal_out - ref_out)) < 5e-2
    assert jnp.max(jnp.abs(pal_ent - ref_ent)) < 5e-2

    ref_out0, ref_ent0 = _reference_forward(x, x, params)
    pal_out0, pal_ent0 = transformer_layer_pallas(x, None, params)
    assert jnp.max(jnp.abs(pal_out0 - ref_out0)) < 5e-2
    assert jnp.max(jnp.abs(pal_ent0 - ref_ent0)) < 5e-2

    assert out.shape == (B, T, E)
    assert mem_x_new.shape == (mem_size, E)
    assert mem_ent_new.shape == (mem_size,)
    assert out0.shape == (B, T, E)
    assert mem_x0.shape == (T, E)
    float(ratio)   # corresponds to .item() in the PyTorch code
    float(ratio0)

    print("KERNEL_OK")
</pallas_src>

<mosaic_0001>
module attributes {stable_mosaic.version = 11 : i64} {
  func.func @_transformer_kernel(%arg0: i32, %arg1: memref<1x8x32xf32, #tpu.memory_space<vmem>>, %arg2: memref<4x8x8xbf16, #tpu.memory_space<vmem>>, %arg3: memref<8x32xbf16, #tpu.memory_space<vmem>>, %arg4: memref<32x96xbf16, #tpu.memory_space<vmem>>, %arg5: memref<1x96xf32, #tpu.memory_space<vmem>>, %arg6: memref<32x32xbf16, #tpu.memory_space<vmem>>, %arg7: memref<1x32xf32, #tpu.memory_space<vmem>>, %arg8: memref<1x32xf32, #tpu.memory_space<vmem>>, %arg9: memref<1x32xf32, #tpu.memory_space<vmem>>, %arg10: memref<32x128xbf16, #tpu.memory_space<vmem>>, %arg11: memref<1x128xf32, #tpu.memory_space<vmem>>, %arg12: memref<128x32xbf16, #tpu.memory_space<vmem>>, %arg13: memref<1x32xf32, #tpu.memory_space<vmem>>, %arg14: memref<1x32xf32, #tpu.memory_space<vmem>>, %arg15: memref<1x32xf32, #tpu.memory_space<vmem>>, %arg16: memref<1x8x32xf32, #tpu.memory_space<vmem>>, %arg17: memref<1x8x1xf32, #tpu.memory_space<vmem>>, %arg18: memref<8x32xbf16, #tpu.memory_space<vmem>>) attributes {dimension_semantics = [#tpu.dimension_semantics<parallel>], iteration_bounds = array<i64: 2>, scalar_prefetch = 0 : i64, scratch_operands = 1 : i64, tpu.core_type = #tpu.core_type<tc>, window_params = [{transform_indices = @transform_0, window_bounds = array<i64: 1, 8, 32>}, {pipeline_mode = #tpu.pipeline_mode<synchronous>, transform_indices = @transform_1, window_bounds = array<i64: 4, 8, 8>}, {pipeline_mode = #tpu.pipeline_mode<synchronous>, transform_indices = @transform_2, window_bounds = array<i64: 8, 32>}, {pipeline_mode = #tpu.pipeline_mode<synchronous>, transform_indices = @transform_3, window_bounds = array<i64: 32, 96>}, {pipeline_mode = #tpu.pipeline_mode<synchronous>, transform_indices = @transform_4, window_bounds = array<i64: 1, 96>}, {pipeline_mode = #tpu.pipeline_mode<synchronous>, transform_indices = @transform_5, window_bounds = array<i64: 32, 32>}, {pipeline_mode = #tpu.pipeline_mode<synchronous>, transform_indices = @transform_6, window_bounds = array<i64: 1, 32>}, {pipeline_mode = #tpu.pipeline_mode<synchronous>, transform_indices = @transform_7, window_bounds = array<i64: 1, 32>}, {pipeline_mode = #tpu.pipeline_mode<synchronous>, transform_indices = @transform_8, window_bounds = array<i64: 1, 32>}, {pipeline_mode = #tpu.pipeline_mode<synchronous>, transform_indices = @transform_9, window_bounds = array<i64: 32, 128>}, {pipeline_mode = #tpu.pipeline_mode<synchronous>, transform_indices = @transform_10, window_bounds = array<i64: 1, 128>}, {pipeline_mode = #tpu.pipeline_mode<synchronous>, transform_indices = @transform_11, window_bounds = array<i64: 128, 32>}, {pipeline_mode = #tpu.pipeline_mode<synchronous>, transform_indices = @transform_12, window_bounds = array<i64: 1, 32>}, {pipeline_mode = #tpu.pipeline_mode<synchronous>, transform_indices = @transform_13, window_bounds = array<i64: 1, 32>}, {pipeline_mode = #tpu.pipeline_mode<synchronous>, transform_indices = @transform_14, window_bounds = array<i64: 1, 32>}, {transform_indices = @transform_15, window_bounds = array<i64: 1, 8, 32>}, {transform_indices = @transform_16, window_bounds = array<i64: 1, 8, 1>}]} {
    %c0 = arith.constant 0 : index
    %c0_0 = arith.constant 0 : index
    %c0_1 = arith.constant 0 : index
    %0 = vector.load %arg1[%c0, %c0_0, %c0_1] : memref<1x8x32xf32, #tpu.memory_space<vmem>>, vector<1x8x32xf32>
    %1 = vector.shape_cast %0 : vector<1x8x32xf32> to vector<8x32xf32>
    %2 = arith.truncf %1 : vector<8x32xf32> to vector<8x32xbf16>
    %c0_2 = arith.constant 0 : index
    %c0_3 = arith.constant 0 : index
    %3 = vector.load %arg4[%c0_2, %c0_3] : memref<32x96xbf16, #tpu.memory_space<vmem>>, vector<32x96xbf16>
    %cst = arith.constant dense<0.000000e+00> : vector<8x96xf32>
    %4 = tpu.matmul %2, %3, %cst {dimension_numbers = #tpu.dot_dimension_numbers<[1], [0], [0], [1], [0, 0, 1, 1], [], []>} : vector<8x32xbf16>, vector<32x96xbf16>, vector<8x96xf32> -> vector<8x96xf32>
    %c0_4 = arith.constant 0 : index
    %c0_5 = arith.constant 0 : index
    %5 = vector.load %arg5[%c0_4, %c0_5] : memref<1x96xf32, #tpu.memory_space<vmem>>, vector<1x96xf32>
    %6 = vector.broadcast %5 : vector<1x96xf32> to vector<8x96xf32>
    %7 = arith.addf %4, %6 : vector<8x96xf32>
    %8 = arith.truncf %7 : vector<8x96xf32> to vector<8x96xbf16>
    %c0_6 = arith.constant 0 : index
    %c0_7 = arith.constant 0 : index
    %9 = vector.load %arg3[%c0_6, %c0_7] : memref<8x32xbf16, #tpu.memory_space<vmem>>, vector<8x32xbf16>
    %10 = vector.extract_strided_slice %8 {offsets = [0, 0], sizes = [8, 8], strides = [1, 1]} : vector<8x96xbf16> to vector<8x8xbf16>
    %11 = vector.extract_strided_slice %8 {offsets = [0, 32], sizes = [8, 8], strides = [1, 1]} : vector<8x96xbf16> to vector<8x8xbf16>
    %12 = vector.extract_strided_slice %8 {offsets = [0, 64], sizes = [8, 8], strides = [1, 1]} : vector<8x96xbf16> to vector<8x8xbf16>
    %13 = vector.shape_cast %10 : vector<8x8xbf16> to vector<1x8x8xbf16>
    %14 = vector.shape_cast %11 : vector<8x8xbf16> to vector<1x8x8xbf16>
    %15 = vector.shape_cast %12 : vector<8x8xbf16> to vector<1x8x8xbf16>
    "tpu.trace_start"() <{level = 10 : i32, message = "btd,bsd->bts"}> : () -> ()
    %cst_8 = arith.constant dense<0.000000e+00> : vector<1x8x8xf32>
    %16 = tpu.matmul %13, %14, %cst_8 {dimension_numbers = #tpu.dot_dimension_numbers<[2], [2], [1], [1], [0, 0, 0, 1, 1, 1], [0], [0]>} : vector<1x8x8xbf16>, vector<1x8x8xbf16>, vector<1x8x8xf32> -> vector<1x8x8xf32>
    "tpu.trace_stop"() : () -> ()
    %cst_9 = arith.constant dense<0xFF800000> : vector<1x8xf32>
    %17 = vector.multi_reduction <maximumf>, %16, %cst_9 [2] : vector<1x8x8xf32> to vector<1x8xf32>
    %18 = vector.shape_cast %17 : vector<1x8xf32> to vector<1x8x1xf32>
    %c0_10 = arith.constant 0 : index
    %c0_11 = arith.constant 0 : index
    %c0_12 = arith.constant 0 : index
    %19 = vector.load %arg2[%c0_10, %c0_11, %c0_12] : memref<4x8x8xbf16, #tpu.memory_space<vmem>>, vector<1x8x8xbf16>
    %20 = vector.shape_cast %19 : vector<1x8x8xbf16> to vector<8x8xbf16>
    %cst_13 = arith.constant dense<0.000000e+00> : vector<8x8xf32>
    %21 = tpu.matmul %10, %20, %cst_13 {dimension_numbers = #tpu.dot_dimension_numbers<[1], [0], [0], [1], [0, 0, 1, 1], [], []>} : vector<8x8xbf16>, vector<8x8xbf16>, vector<8x8xf32> -> vector<8x8xf32>
    %22 = vector.shape_cast %21 : vector<8x8xf32> to vector<1x8x8xf32>
    %cst_14 = arith.constant dense<0xFF800000> : vector<1x8xf32>
    %23 = vector.multi_reduction <maximumf>, %22, %cst_14 [2] : vector<1x8x8xf32> to vector<1x8xf32>
    %24 = vector.shape_cast %23 : vector<1x8xf32> to vector<1x8x1xf32>
    %25 = arith.maximumf %18, %24 : vector<1x8x1xf32>
    %26 = vector.broadcast %25 : vector<1x8x1xf32> to vector<1x8x8xf32>
    %27 = arith.subf %16, %26 : vector<1x8x8xf32>
    %28 = math.exp %27 : vector<1x8x8xf32>
    %cst_15 = arith.constant dense<0.000000e+00> : vector<1x8xf32>
    %29 = vector.multi_reduction <add>, %28, %cst_15 [2] : vector<1x8x8xf32> to vector<1x8xf32>
    %30 = vector.shape_cast %29 : vector<1x8xf32> to vector<1x8x1xf32>
    %31 = arith.mulf %27, %28 : vector<1x8x8xf32>
    %cst_16 = arith.constant dense<0.000000e+00> : vector<1x8xf32>
    %32 = vector.multi_reduction <add>, %31, %cst_16 [2] : vector<1x8x8xf32> to vector<1x8xf32>
    %33 = vector.shape_cast %32 : vector<1x8xf32> to vector<1x8x1xf32>
    %34 = vector.broadcast %25 : vector<1x8x1xf32> to vector<1x8x8xf32>
    %35 = arith.subf %22, %34 : vector<1x8x8xf32>
    %36 = math.exp %35 : vector<1x8x8xf32>
    %cst_17 = arith.constant dense<0.000000e+00> : vector<1x8xf32>
    %37 = vector.multi_reduction <add>, %36, %cst_17 [2] : vector<1x8x8xf32> to vector<1x8xf32>
    %38 = vector.shape_cast %37 : vector<1x8xf32> to vector<1x8x1xf32>
    %39 = arith.addf %30, %38 : vector<1x8x1xf32>
    %40 = arith.mulf %35, %36 : vector<1x8x8xf32>
    %cst_18 = arith.constant dense<0.000000e+00> : vector<1x8xf32>
    %41 = vector.multi_reduction <add>, %40, %cst_18 [2] : vector<1x8x8xf32> to vector<1x8xf32>
    %42 = vector.shape_cast %41 : vector<1x8xf32> to vector<1x8x1xf32>
    %43 = arith.addf %33, %42 : vector<1x8x1xf32>
    %44 = math.log %39 : vector<1x8x1xf32>
    %45 = arith.divf %43, %39 : vector<1x8x1xf32>
    %46 = arith.subf %44, %45 : vector<1x8x1xf32>
    %47 = tpu.reciprocal %39 {approx = true} : vector<1x8x1xf32> -> vector<1x8x1xf32>
    %48 = vector.broadcast %47 : vector<1x8x1xf32> to vector<1x8x8xf32>
    %49 = arith.mulf %28, %48 : vector<1x8x8xf32>
    %50 = arith.truncf %49 : vector<1x8x8xf32> to vector<1x8x8xbf16>
    "tpu.trace_start"() <{level = 10 : i32, message = "bts,bsd->btd"}> : () -> ()
    %cst_19 = arith.constant dense<0.000000e+00> : vector<1x8x8xf32>
    %51 = tpu.matmul %50, %15, %cst_19 {dimension_numbers = #tpu.dot_dimension_numbers<[2], [1], [1], [2], [0, 0, 0, 1, 1, 2], [0], [0]>} : vector<1x8x8xbf16>, vector<1x8x8xbf16>, vector<1x8x8xf32> -> vector<1x8x8xf32>
    "tpu.trace_stop"() : () -> ()
    %52 = vector.broadcast %47 : vector<1x8x1xf32> to vector<1x8x8xf32>
    %53 = arith.mulf %36, %52 : vector<1x8x8xf32>
    %54 = arith.truncf %53 : vector<1x8x8xf32> to vector<1x8x8xbf16>
    %55 = vector.shape_cast %54 : vector<1x8x8xbf16> to vector<8x8xbf16>
    %56 = vector.extract_strided_slice %9 {offsets = [0, 0], sizes = [8, 8], strides = [1, 1]} : vector<8x32xbf16> to vector<8x8xbf16>
    %cst_20 = arith.constant dense<0.000000e+00> : vector<8x8xf32>
    %57 = tpu.matmul %55, %56, %cst_20 {dimension_numbers = #tpu.dot_dimension_numbers<[1], [0], [0], [1], [0, 0, 1, 1], [], []>} : vector<8x8xbf16>, vector<8x8xbf16>, vector<8x8xf32> -> vector<8x8xf32>
    %58 = vector.shape_cast %57 : vector<8x8xf32> to vector<1x8x8xf32>
    %59 = arith.addf %51, %58 : vector<1x8x8xf32>
    %60 = vector.shape_cast %59 : vector<1x8x8xf32> to vector<8x8xf32>
    %61 = arith.truncf %60 : vector<8x8xf32> to vector<8x8xbf16>
    %c0_21 = arith.constant 0 : index
    %c0_22 = arith.constant 0 : index
    %62 = vector.load %arg18[%c0_21, %c0_22] : memref<8x32xbf16, #tpu.memory_space<vmem>>, vector<8x8xbf16>
    tpu.vector_store %arg18[%c0_21, %c0_22], %61 {strides = array<i32>} : memref<8x32xbf16, #tpu.memory_space<vmem>>, vector<8x8xbf16>,
    %63 = vector.extract_strided_slice %8 {offsets = [0, 8], sizes = [8, 8], strides = [1, 1]} : vector<8x96xbf16> to vector<8x8xbf16>
    %64 = vector.extract_strided_slice %8 {offsets = [0, 40], sizes = [8, 8], strides = [1, 1]} : vector<8x96xbf16> to vector<8x8xbf16>
    %65 = vector.extract_strided_slice %8 {offsets = [0, 72], sizes = [8, 8], strides = [1, 1]} : vector<8x96xbf16> to vector<8x8xbf16>
    %66 = vector.shape_cast %63 : vector<8x8xbf16> to vector<1x8x8xbf16>
    %67 = vector.shape_cast %64 : vector<8x8xbf16> to vector<1x8x8xbf16>
    %68 = vector.shape_cast %65 : vector<8x8xbf16> to vector<1x8x8xbf16>
    "tpu.trace_start"() <{level = 10 : i32, message = "btd,bsd->bts"}> : () -> ()
    %cst_23 = arith.constant dense<0.000000e+00> : vector<1x8x8xf32>
    %69 = tpu.matmul %66, %67, %cst_23 {dimension_numbers = #tpu.dot_dimension_numbers<[2], [2], [1], [1], [0, 0, 0, 1, 1, 1], [0], [0]>} : vector<1x8x8xbf16>, vector<1x8x8xbf16>, vector<1x8x8xf32> -> vector<1x8x8xf32>
    "tpu.trace_stop"() : () -> ()
    %cst_24 = arith.constant dense<0xFF800000> : vector<1x8xf32>
    %70 = vector.multi_reduction <maximumf>, %69, %cst_24 [2] : vector<1x8x8xf32> to vector<1x8xf32>
    %71 = vector.shape_cast %70 : vector<1x8xf32> to vector<1x8x1xf32>
    %c1 = arith.constant 1 : index
    %c0_25 = arith.constant 0 : index
    %c0_26 = arith.constant 0 : index
    %72 = vector.load %arg2[%c1, %c0_25, %c0_26] : memref<4x8x8xbf16, #tpu.memory_space<vmem>>, vector<1x8x8xbf16>
    %73 = vector.shape_cast %72 : vector<1x8x8xbf16> to vector<8x8xbf16>
    %cst_27 = arith.constant dense<0.000000e+00> : vector<8x8xf32>
    %74 = tpu.matmul %63, %73, %cst_27 {dimension_numbers = #tpu.dot_dimension_numbers<[1], [0], [0], [1], [0, 0, 1, 1], [], []>} : vector<8x8xbf16>, vector<8x8xbf16>, vector<8x8xf32> -> vector<8x8xf32>
    %75 = vector.shape_cast %74 : vector<8x8xf32> to vector<1x8x8xf32>
    %cst_28 = arith.constant dense<0xFF800000> : vector<1x8xf32>
    %76 = vector.multi_reduction <maximumf>, %75, %cst_28 [2] : vector<1x8x8xf32> to vector<1x8xf32>
    %77 = vector.shape_cast %76 : vector<1x8xf32> to vector<1x8x1xf32>
    %78 = arith.maximumf %71, %77 : vector<1x8x1xf32>
    %79 = vector.broadcast %78 : vector<1x8x1xf32> to vector<1x8x8xf32>
    %80 = arith.subf %69, %79 : vector<1x8x8xf32>
    %81 = math.exp %80 : vector<1x8x8xf32>
    %cst_29 = arith.constant dense<0.000000e+00> : vector<1x8xf32>
    %82 = vector.multi_reduction <add>, %81, %cst_29 [2] : vector<1x8x8xf32> to vector<1x8xf32>
    %83 = vector.shape_cast %82 : vector<1x8xf32> to vector<1x8x1xf32>
    %84 = arith.mulf %80, %81 : vector<1x8x8xf32>
    %cst_30 = arith.constant dense<0.000000e+00> : vector<1x8xf32>
    %85 = vector.multi_reduction <add>, %84, %cst_30 [2] : vector<1x8x8xf32> to vector<1x8xf32>
    %86 = vector.shape_cast %85 : vector<1x8xf32> to vector<1x8x1xf32>
    %87 = vector.broadcast %78 : vector<1x8x1xf32> to vector<1x8x8xf32>
    %88 = arith.subf %75, %87 : vector<1x8x8xf32>
    %89 = math.exp %88 : vector<1x8x8xf32>
    %cst_31 = arith.constant dense<0.000000e+00> : vector<1x8xf32>
    %90 = vector.multi_reduction <add>, %89, %cst_31 [2] : vector<1x8x8xf32> to vector<1x8xf32>
    %91 = vector.shape_cast %90 : vector<1x8xf32> to vector<1x8x1xf32>
    %92 = arith.addf %83, %91 : vector<1x8x1xf32>
    %93 = arith.mulf %88, %89 : vector<1x8x8xf32>
    %cst_32 = arith.constant dense<0.000000e+00> : vector<1x8xf32>
    %94 = vector.multi_reduction <add>, %93, %cst_32 [2] : vector<1x8x8xf32> to vector<1x8xf32>
    %95 = vector.shape_cast %94 : vector<1x8xf32> to vector<1x8x1xf32>
    %96 = arith.addf %86, %95 : vector<1x8x1xf32>
    %97 = math.log %92 : vector<1x8x1xf32>
    %98 = arith.divf %96, %92 : vector<1x8x1xf32>
    %99 = arith.subf %97, %98 : vector<1x8x1xf32>
    %100 = arith.maximumf %46, %99 : vector<1x8x1xf32>
    %101 = tpu.reciprocal %92 {approx = true} : vector<1x8x1xf32> -> vector<1x8x1xf32>
    %102 = vector.broadcast %101 : vector<1x8x1xf32> to vector<1x8x8xf32>
    %103 = arith.mulf %81, %102 : vector<1x8x8xf32>
    %104 = arith.truncf %103 : vector<1x8x8xf32> to vector<1x8x8xbf16>
    "tpu.trace_start"() <{level = 10 : i32, message = "bts,bsd->btd"}> : () -> ()
    %cst_33 = arith.constant dense<0.000000e+00> : vector<1x8x8xf32>
    %105 = tpu.matmul %104, %68, %cst_33 {dimension_numbers = #tpu.dot_dimension_numbers<[2], [1], [1], [2], [0, 0, 0, 1, 1, 2], [0], [0]>} : vector<1x8x8xbf16>, vector<1x8x8xbf16>, vector<1x8x8xf32> -> vector<1x8x8xf32>
    "tpu.trace_stop"() : () -> ()
    %106 = vector.broadcast %101 : vector<1x8x1xf32> to vector<1x8x8xf32>
    %107 = arith.mulf %89, %106 : vector<1x8x8xf32>
    %108 = arith.truncf %107 : vector<1x8x8xf32> to vector<1x8x8xbf16>
    %109 = vector.shape_cast %108 : vector<1x8x8xbf16> to vector<8x8xbf16>
    %110 = vector.extract_strided_slice %9 {offsets = [0, 8], sizes = [8, 8], strides = [1, 1]} : vector<8x32xbf16> to vector<8x8xbf16>
    %cst_34 = arith.constant dense<0.000000e+00> : vector<8x8xf32>
    %111 = tpu.matmul %109, %110, %cst_34 {dimension_numbers = #tpu.dot_dimension_numbers<[1], [0], [0], [1], [0, 0, 1, 1], [], []>} : vector<8x8xbf16>, vector<8x8xbf16>, vector<8x8xf32> -> vector<8x8xf32>
    %112 = vector.shape_cast %111 : vector<8x8xf32> to vector<1x8x8xf32>
    %113 = arith.addf %105, %112 : vector<1x8x8xf32>
    %114 = vector.shape_cast %113 : vector<1x8x8xf32> to vector<8x8xf32>
    %115 = arith.truncf %114 : vector<8x8xf32> to vector<8x8xbf16>
    %c0_35 = arith.constant 0 : index
    %c8 = arith.constant 8 : index
    %116 = vector.load %arg18[%c0_35, %c8] : memref<8x32xbf16, #tpu.memory_space<vmem>>, vector<8x8xbf16>
    tpu.vector_store %arg18[%c0_35, %c8], %115 {strides = array<i32>} : memref<8x32xbf16, #tpu.memory_space<vmem>>, vector<8x8xbf16>,
    %117 = vector.extract_strided_slice %8 {offsets = [0, 16], sizes = [8, 8], strides = [1, 1]} : vector<8x96xbf16> to vector<8x8xbf16>
    %118 = vector.extract_strided_slice %8 {offsets = [0, 48], sizes = [8, 8], strides = [1, 1]} : vector<8x96xbf16> to vector<8x8xbf16>
    %119 = vector.extract_strided_slice %8 {offsets = [0, 80], sizes = [8, 8], strides = [1, 1]} : vector<8x96xbf16> to vector<8x8xbf16>
    %120 = vector.shape_cast %117 : vector<8x8xbf16> to vector<1x8x8xbf16>
    %121 = vector.shape_cast %118 : vector<8x8xbf16> to vector<1x8x8xbf16>
    %122 = vector.shape_cast %119 : vector<8x8xbf16> to vector<1x8x8xbf16>
    "tpu.trace_start"() <{level = 10 : i32, message = "btd,bsd->bts"}> : () -> ()
    %cst_36 = arith.constant dense<0.000000e+00> : vector<1x8x8xf32>
    %123 = tpu.matmul %120, %121, %cst_36 {dimension_numbers = #tpu.dot_dimension_numbers<[2], [2], [1], [1], [0, 0, 0, 1, 1, 1], [0], [0]>} : vector<1x8x8xbf16>, vector<1x8x8xbf16>, vector<1x8x8xf32> -> vector<1x8x8xf32>
    "tpu.trace_stop"() : () -> ()
    %cst_37 = arith.constant dense<0xFF800000> : vector<1x8xf32>
    %124 = vector.multi_reduction <maximumf>, %123, %cst_37 [2] : vector<1x8x8xf32> to vector<1x8xf32>
    %125 = vector.shape_cast %124 : vector<1x8xf32> to vector<1x8x1xf32>
    %c2 = arith.constant 2 : index
    %c0_38 = arith.constant 0 : index
    %c0_39 = arith.constant 0 : index
    %126 = vector.load %arg2[%c2, %c0_38, %c0_39] : memref<4x8x8xbf16, #tpu.memory_space<vmem>>, vector<1x8x8xbf16>
    %127 = vector.shape_cast %126 : vector<1x8x8xbf16> to vector<8x8xbf16>
    %cst_40 = arith.constant dense<0.000000e+00> : vector<8x8xf32>
    %128 = tpu.matmul %117, %127, %cst_40 {dimension_numbers = #tpu.dot_dimension_numbers<[1], [0], [0], [1], [0, 0, 1, 1], [], []>} : vector<8x8xbf16>, vector<8x8xbf16>, vector<8x8xf32> -> vector<8x8xf32>
    %129 = vector.shape_cast %128 : vector<8x8xf32> to vector<1x8x8xf32>
    %cst_41 = arith.constant dense<0xFF800000> : vector<1x8xf32>
    %130 = vector.multi_reduction <maximumf>, %129, %cst_41 [2] : vector<1x8x8xf32> to vector<1x8xf32>
    %131 = vector.shape_cast %130 : vector<1x8xf32> to vector<1x8x1xf32>
    %132 = arith.maximumf %125, %131 : vector<1x8x1xf32>
    %133 = vector.broadcast %132 : vector<1x8x1xf32> to vector<1x8x8xf32>
    %134 = arith.subf %123, %133 : vector<1x8x8xf32>
    %135 = math.exp %134 : vector<1x8x8xf32>
    %cst_42 = arith.constant dense<0.000000e+00> : vector<1x8xf32>
    %136 = vector.multi_reduction <add>, %135, %cst_42 [2] : vector<1x8x8xf32> to vector<1x8xf32>
    %137 = vector.shape_cast %136 : vector<1x8xf32> to vector<1x8x1xf32>
    %138 = arith.mulf %134, %135 : vector<1x8x8xf32>
    %cst_43 = arith.constant dense<0.000000e+00> : vector<1x8xf32>
    %139 = vector.multi_reduction <add>, %138, %cst_43 [2] : vector<1x8x8xf32> to vector<1x8xf32>
    %140 = vector.shape_cast %139 : vector<1x8xf32> to vector<1x8x1xf32>
    %141 = vector.broadcast %132 : vector<1x8x1xf32> to vector<1x8x8xf32>
    %142 = arith.subf %129, %141 : vector<1x8x8xf32>
    %143 = math.exp %142 : vector<1x8x8xf32>
    %cst_44 = arith.constant dense<0.000000e+00> : vector<1x8xf32>
    %144 = vector.multi_reduction <add>, %143, %cst_44 [2] : vector<1x8x8xf32> to vector<1x8xf32>
    %145 = vector.shape_cast %144 : vector<1x8xf32> to vector<1x8x1xf32>
    %146 = arith.addf %137, %145 : vector<1x8x1xf32>
    %147 = arith.mulf %142, %143 : vector<1x8x8xf32>
    %cst_45 = arith.constant dense<0.000000e+00> : vector<1x8xf32>
    %148 = vector.multi_reduction <add>, %147, %cst_45 [2] : vector<1x8x8xf32> to vector<1x8xf32>
    %149 = vector.shape_cast %148 : vector<1x8xf32> to vector<1x8x1xf32>
    %150 = arith.addf %140, %149 : vector<1x8x1xf32>
    %151 = math.log %146 : vector<1x8x1xf32>
    %152 = arith.divf %150, %146 : vector<1x8x1xf32>
    %153 = arith.subf %151, %152 : vector<1x8x1xf32>
    %154 = arith.maximumf %100, %153 : vector<1x8x1xf32>
    %155 = tpu.reciprocal %146 {approx = true} : vector<1x8x1xf32> -> vector<1x8x1xf32>
    %156 = vector.broadcast %155 : vector<1x8x1xf32> to vector<1x8x8xf32>
    %157 = arith.mulf %135, %156 : vector<1x8x8xf32>
    %158 = arith.truncf %157 : vector<1x8x8xf32> to vector<1x8x8xbf16>
    "tpu.trace_start"() <{level = 10 : i32, message = "bts,bsd->btd"}> : () -> ()
    %cst_46 = arith.constant dense<0.000000e+00> : vector<1x8x8xf32>
    %159 = tpu.matmul %158, %122, %cst_46 {dimension_numbers = #tpu.dot_dimension_numbers<[2], [1], [1], [2], [0, 0, 0, 1, 1, 2], [0], [0]>} : vector<1x8x8xbf16>, vector<1x8x8xbf16>, vector<1x8x8xf32> -> vector<1x8x8xf32>
    "tpu.trace_stop"() : () -> ()
    %160 = vector.broadcast %155 : vector<1x8x1xf32> to vector<1x8x8xf32>
    %161 = arith.mulf %143, %160 : vector<1x8x8xf32>
    %162 = arith.truncf %161 : vector<1x8x8xf32> to vector<1x8x8xbf16>
    %163 = vector.shape_cast %162 : vector<1x8x8xbf16> to vector<8x8xbf16>
    %164 = vector.extract_strided_slice %9 {offsets = [0, 16], sizes = [8, 8], strides = [1, 1]} : vector<8x32xbf16> to vector<8x8xbf16>
    %cst_47 = arith.constant dense<0.000000e+00> : vector<8x8xf32>
    %165 = tpu.matmul %163, %164, %cst_47 {dimension_numbers = #tpu.dot_dimension_numbers<[1], [0], [0], [1], [0, 0, 1, 1], [], []>} : vector<8x8xbf16>, vector<8x8xbf16>, vector<8x8xf32> -> vector<8x8xf32>
    %166 = vector.shape_cast %165 : vector<8x8xf32> to vector<1x8x8xf32>
    %167 = arith.addf %159, %166 : vector<1x8x8xf32>
    %168 = vector.shape_cast %167 : vector<1x8x8xf32> to vector<8x8xf32>
    %169 = arith.truncf %168 : vector<8x8xf32> to vector<8x8xbf16>
    %c0_48 = arith.constant 0 : index
    %c16 = arith.constant 16 : index
    %170 = vector.load %arg18[%c0_48, %c16] : memref<8x32xbf16, #tpu.memory_space<vmem>>, vector<8x8xbf16>
    tpu.vector_store %arg18[%c0_48, %c16], %169 {strides = array<i32>} : memref<8x32xbf16, #tpu.memory_space<vmem>>, vector<8x8xbf16>,
    %171 = vector.extract_strided_slice %8 {offsets = [0, 24], sizes = [8, 8], strides = [1, 1]} : vector<8x96xbf16> to vector<8x8xbf16>
    %172 = vector.extract_strided_slice %8 {offsets = [0, 56], sizes = [8, 8], strides = [1, 1]} : vector<8x96xbf16> to vector<8x8xbf16>
    %173 = vector.extract_strided_slice %8 {offsets = [0, 88], sizes = [8, 8], strides = [1, 1]} : vector<8x96xbf16> to vector<8x8xbf16>
    %174 = vector.shape_cast %171 : vector<8x8xbf16> to vector<1x8x8xbf16>
    %175 = vector.shape_cast %172 : vector<8x8xbf16> to vector<1x8x8xbf16>
    %176 = vector.shape_cast %173 : vector<8x8xbf16> to vector<1x8x8xbf16>
    "tpu.trace_start"() <{level = 10 : i32, message = "btd,bsd->bts"}> : () -> ()
    %cst_49 = arith.constant dense<0.000000e+00> : vector<1x8x8xf32>
    %177 = tpu.matmul %174, %175, %cst_49 {dimension_numbers = #tpu.dot_dimension_numbers<[2], [2], [1], [1], [0, 0, 0, 1, 1, 1], [0], [0]>} : vector<1x8x8xbf16>, vector<1x8x8xbf16>, vector<1x8x8xf32> -> vector<1x8x8xf32>
    "tpu.trace_stop"() : () -> ()
    %cst_50 = arith.constant dense<0xFF800000> : vector<1x8xf32>
    %178 = vector.multi_reduction <maximumf>, %177, %cst_50 [2] : vector<1x8x8xf32> to vector<1x8xf32>
    %179 = vector.shape_cast %178 : vector<1x8xf32> to vector<1x8x1xf32>
    %c3 = arith.constant 3 : index
    %c0_51 = arith.constant 0 : index
    %c0_52 = arith.constant 0 : index
    %180 = vector.load %arg2[%c3, %c0_51, %c0_52] : memref<4x8x8xbf16, #tpu.memory_space<vmem>>, vector<1x8x8xbf16>
    %181 = vector.shape_cast %180 : vector<1x8x8xbf16> to vector<8x8xbf16>
    %cst_53 = arith.constant dense<0.000000e+00> : vector<8x8xf32>
    %182 = tpu.matmul %171, %181, %cst_53 {dimension_numbers = #tpu.dot_dimension_numbers<[1], [0], [0], [1], [0, 0, 1, 1], [], []>} : vector<8x8xbf16>, vector<8x8xbf16>, vector<8x8xf32> -> vector<8x8xf32>
    %183 = vector.shape_cast %182 : vector<8x8xf32> to vector<1x8x8xf32>
    %cst_54 = arith.constant dense<0xFF800000> : vector<1x8xf32>
    %184 = vector.multi_reduction <maximumf>, %183, %cst_54 [2] : vector<1x8x8xf32> to vector<1x8xf32>
    %185 = vector.shape_cast %184 : vector<1x8xf32> to vector<1x8x1xf32>
    %186 = arith.maximumf %179, %185 : vector<1x8x1xf32>
    %187 = vector.broadcast %186 : vector<1x8x1xf32> to vector<1x8x8xf32>
    %188 = arith.subf %177, %187 : vector<1x8x8xf32>
    %189 = math.exp %188 : vector<1x8x8xf32>
    %cst_55 = arith.constant dense<0.000000e+00> : vector<1x8xf32>
    %190 = vector.multi_reduction <add>, %189, %cst_55 [2] : vector<1x8x8xf32> to vector<1x8xf32>
    %191 = vector.shape_cast %190 : vector<1x8xf32> to vector<1x8x1xf32>
    %192 = arith.mulf %188, %189 : vector<1x8x8xf32>
    %cst_56 = arith.constant dense<0.000000e+00> : vector<1x8xf32>
    %193 = vector.multi_reduction <add>, %192, %cst_56 [2] : vector<1x8x8xf32> to vector<1x8xf32>
    %194 = vector.shape_cast %193 : vector<1x8xf32> to vector<1x8x1xf32>
    %195 = vector.broadcast %186 : vector<1x8x1xf32> to vector<1x8x8xf32>
    %196 = arith.subf %183, %195 : vector<1x8x8xf32>
    %197 = math.exp %196 : vector<1x8x8xf32>
    %cst_57 = arith.constant dense<0.000000e+00> : vector<1x8xf32>
    %198 = vector.multi_reduction <add>, %197, %cst_57 [2] : vector<1x8x8xf32> to vector<1x8xf32>
    %199 = vector.shape_cast %198 : vector<1x8xf32> to vector<1x8x1xf32>
    %200 = arith.addf %191, %199 : vector<1x8x1xf32>
    %201 = arith.mulf %196, %197 : vector<1x8x8xf32>
    %cst_58 = arith.constant dense<0.000000e+00> : vector<1x8xf32>
    %202 = vector.multi_reduction <add>, %201, %cst_58 [2] : vector<1x8x8xf32> to vector<1x8xf32>
    %203 = vector.shape_cast %202 : vector<1x8xf32> to vector<1x8x1xf32>
    %204 = arith.addf %194, %203 : vector<1x8x1xf32>
    %205 = math.log %200 : vector<1x8x1xf32>
    %206 = arith.divf %204, %200 : vector<1x8x1xf32>
    %207 = arith.subf %205, %206 : vector<1x8x1xf32>
    %208 = arith.maximumf %154, %207 : vector<1x8x1xf32>
    %209 = tpu.reciprocal %200 {approx = true} : vector<1x8x1xf32> -> vector<1x8x1xf32>
    %210 = vector.broadcast %209 : vector<1x8x1xf32> to vector<1x8x8xf32>
    %211 = arith.mulf %189, %210 : vector<1x8x8xf32>
    %212 = arith.truncf %211 : vector<1x8x8xf32> to vector<1x8x8xbf16>
    "tpu.trace_start"() <{level = 10 : i32, message = "bts,bsd->btd"}> : () -> ()
    %cst_59 = arith.constant dense<0.000000e+00> : vector<1x8x8xf32>
    %213 = tpu.matmul %212, %176, %cst_59 {dimension_numbers = #tpu.dot_dimension_numbers<[2], [1], [1], [2], [0, 0, 0, 1, 1, 2], [0], [0]>} : vector<1x8x8xbf16>, vector<1x8x8xbf16>, vector<1x8x8xf32> -> vector<1x8x8xf32>
    "tpu.trace_stop"() : () -> ()
    %214 = vector.broadcast %209 : vector<1x8x1xf32> to vector<1x8x8xf32>
    %215 = arith.mulf %197, %214 : vector<1x8x8xf32>
    %216 = arith.truncf %215 : vector<1x8x8xf32> to vector<1x8x8xbf16>
    %217 = vector.shape_cast %216 : vector<1x8x8xbf16> to vector<8x8xbf16>
    %218 = vector.extract_strided_slice %9 {offsets = [0, 24], sizes = [8, 8], strides = [1, 1]} : vector<8x32xbf16> to vector<8x8xbf16>
    %cst_60 = arith.constant dense<0.000000e+00> : vector<8x8xf32>
    %219 = tpu.matmul %217, %218, %cst_60 {dimension_numbers = #tpu.dot_dimension_numbers<[1], [0], [0], [1], [0, 0, 1, 1], [], []>} : vector<8x8xbf16>, vector<8x8xbf16>, vector<8x8xf32> -> vector<8x8xf32>
    %220 = vector.shape_cast %219 : vector<8x8xf32> to vector<1x8x8xf32>
    %221 = arith.addf %213, %220 : vector<1x8x8xf32>
    %222 = vector.shape_cast %221 : vector<1x8x8xf32> to vector<8x8xf32>
    %223 = arith.truncf %222 : vector<8x8xf32> to vector<8x8xbf16>
    %c0_61 = arith.constant 0 : index
    %c24 = arith.constant 24 : index
    %224 = vector.load %arg18[%c0_61, %c24] : memref<8x32xbf16, #tpu.memory_space<vmem>>, vector<8x8xbf16>
    tpu.vector_store %arg18[%c0_61, %c24], %223 {strides = array<i32>} : memref<8x32xbf16, #tpu.memory_space<vmem>>, vector<8x8xbf16>,
    %c0_62 = arith.constant 0 : index
    %c0_63 = arith.constant 0 : index
    %c0_64 = arith.constant 0 : index
    %225 = vector.load %arg17[%c0_62, %c0_63, %c0_64] : memref<1x8x1xf32, #tpu.memory_space<vmem>>, vector<1x8x1xf32>
    tpu.vector_store %arg17[%c0_62, %c0_63, %c0_64], %208 {strides = array<i32>} : memref<1x8x1xf32, #tpu.memory_space<vmem>>, vector<1x8x1xf32>,
    %c0_65 = arith.constant 0 : index
    %c0_66 = arith.constant 0 : index
    %226 = vector.load %arg18[%c0_65, %c0_66] : memref<8x32xbf16, #tpu.memory_space<vmem>>, vector<8x32xbf16>
    %c0_67 = arith.constant 0 : index
    %c0_68 = arith.constant 0 : index
    %227 = vector.load %arg6[%c0_67, %c0_68] : memref<32x32xbf16, #tpu.memory_space<vmem>>, vector<32x32xbf16>
    %cst_69 = arith.constant dense<0.000000e+00> : vector<8x32xf32>
    %228 = tpu.matmul %226, %227, %cst_69 {dimension_numbers = #tpu.dot_dimension_numbers<[1], [0], [0], [1], [0, 0, 1, 1], [], []>} : vector<8x32xbf16>, vector<32x32xbf16>, vector<8x32xf32> -> vector<8x32xf32>
    %c0_70 = arith.constant 0 : index
    %c0_71 = arith.constant 0 : index
    %229 = vector.load %arg7[%c0_70, %c0_71] : memref<1x32xf32, #tpu.memory_space<vmem>>, vector<1x32xf32>
    %230 = vector.broadcast %229 : vector<1x32xf32> to vector<8x32xf32>
    %231 = arith.addf %228, %230 : vector<8x32xf32>
    %232 = arith.addf %1, %231 : vector<8x32xf32>
    %cst_72 = arith.constant dense<0.000000e+00> : vector<8xf32>
    %233 = vector.multi_reduction <add>, %232, %cst_72 [1] : vector<8x32xf32> to vector<8xf32>
    %234 = vector.shape_cast %233 : vector<8xf32> to vector<8x1xf32>
    %cst_73 = arith.constant 3.200000e+01 : f32
    %235 = vector.broadcast %cst_73 : f32 to vector<8x1xf32>
    %236 = arith.divf %234, %235 : vector<8x1xf32>
    %237 = vector.broadcast %236 : vector<8x1xf32> to vector<8x32xf32>
    %238 = arith.subf %232, %237 : vector<8x32xf32>
    %239 = arith.mulf %238, %238 : vector<8x32xf32>
    %cst_74 = arith.constant dense<0.000000e+00> : vector<8xf32>
    %240 = vector.multi_reduction <add>, %239, %cst_74 [1] : vector<8x32xf32> to vector<8xf32>
    %241 = vector.shape_cast %240 : vector<8xf32> to vector<8x1xf32>
    %cst_75 = arith.constant 3.200000e+01 : f32
    %242 = vector.broadcast %cst_75 : f32 to vector<8x1xf32>
    %243 = arith.divf %241, %242 : vector<8x1xf32>
    %244 = vector.broadcast %236 : vector<8x1xf32> to vector<8x32xf32>
    %245 = arith.subf %232, %244 : vector<8x32xf32>
    %cst_76 = arith.constant 9.99999974E-6 : f32
    %246 = vector.broadcast %cst_76 : f32 to vector<8x1xf32>
    %247 = arith.addf %243, %246 : vector<8x1xf32>
    %248 = math.rsqrt %247 : vector<8x1xf32>
    %249 = vector.broadcast %248 : vector<8x1xf32> to vector<8x32xf32>
    %250 = arith.mulf %245, %249 : vector<8x32xf32>
    %c0_77 = arith.constant 0 : index
    %c0_78 = arith.constant 0 : index
    %251 = vector.load %arg8[%c0_77, %c0_78] : memref<1x32xf32, #tpu.memory_space<vmem>>, vector<1x32xf32>
    %252 = vector.broadcast %251 : vector<1x32xf32> to vector<8x32xf32>
    %253 = arith.mulf %250, %252 : vector<8x32xf32>
    %c0_79 = arith.constant 0 : index
    %c0_80 = arith.constant 0 : index
    %254 = vector.load %arg9[%c0_79, %c0_80] : memref<1x32xf32, #tpu.memory_space<vmem>>, vector<1x32xf32>
    %255 = vector.broadcast %254 : vector<1x32xf32> to vector<8x32xf32>
    %256 = arith.addf %253, %255 : vector<8x32xf32>
    %257 = arith.truncf %256 : vector<8x32xf32> to vector<8x32xbf16>
    %c0_81 = arith.constant 0 : index
    %c0_82 = arith.constant 0 : index
    %258 = vector.load %arg10[%c0_81, %c0_82] : memref<32x128xbf16, #tpu.memory_space<vmem>>, vector<32x128xbf16>
    %cst_83 = arith.constant dense<0.000000e+00> : vector<8x128xf32>
    %259 = tpu.matmul %257, %258, %cst_83 {dimension_numbers = #tpu.dot_dimension_numbers<[1], [0], [0], [1], [0, 0, 1, 1], [], []>} : vector<8x32xbf16>, vector<32x128xbf16>, vector<8x128xf32> -> vector<8x128xf32>
    %c0_84 = arith.constant 0 : index
    %c0_85 = arith.constant 0 : index
    %260 = vector.load %arg11[%c0_84, %c0_85] : memref<1x128xf32, #tpu.memory_space<vmem>>, vector<1x128xf32>
    %261 = vector.broadcast %260 : vector<1x128xf32> to vector<8x128xf32>
    %262 = arith.addf %259, %261 : vector<8x128xf32>
    %cst_86 = arith.constant 0.000000e+00 : f32
    %263 = vector.broadcast %cst_86 : f32 to vector<8x128xf32>
    %264 = arith.maximumf %262, %263 : vector<8x128xf32>
    %265 = arith.truncf %264 : vector<8x128xf32> to vector<8x128xbf16>
    %c0_87 = arith.constant 0 : index
    %c0_88 = arith.constant 0 : index
    %266 = vector.load %arg12[%c0_87, %c0_88] : memref<128x32xbf16, #tpu.memory_space<vmem>>, vector<128x32xbf16>
    %cst_89 = arith.constant dense<0.000000e+00> : vector<8x32xf32>
    %267 = tpu.matmul %265, %266, %cst_89 {dimension_numbers = #tpu.dot_dimension_numbers<[1], [0], [0], [1], [0, 0, 1, 1], [], []>} : vector<8x128xbf16>, vector<128x32xbf16>, vector<8x32xf32> -> vector<8x32xf32>
    %c0_90 = arith.constant 0 : index
    %c0_91 = arith.constant 0 : index
    %268 = vector.load %arg13[%c0_90, %c0_91] : memref<1x32xf32, #tpu.memory_space<vmem>>, vector<1x32xf32>
    %269 = vector.broadcast %268 : vector<1x32xf32> to vector<8x32xf32>
    %270 = arith.addf %267, %269 : vector<8x32xf32>
    %271 = arith.addf %256, %270 : vector<8x32xf32>
    %cst_92 = arith.constant dense<0.000000e+00> : vector<8xf32>
    %272 = vector.multi_reduction <add>, %271, %cst_92 [1] : vector<8x32xf32> to vector<8xf32>
    %273 = vector.shape_cast %272 : vector<8xf32> to vector<8x1xf32>
    %cst_93 = arith.constant 3.200000e+01 : f32
    %274 = vector.broadcast %cst_93 : f32 to vector<8x1xf32>
    %275 = arith.divf %273, %274 : vector<8x1xf32>
    %276 = vector.broadcast %275 : vector<8x1xf32> to vector<8x32xf32>
    %277 = arith.subf %271, %276 : vector<8x32xf32>
    %278 = arith.mulf %277, %277 : vector<8x32xf32>
    %cst_94 = arith.constant dense<0.000000e+00> : vector<8xf32>
    %279 = vector.multi_reduction <add>, %278, %cst_94 [1] : vector<8x32xf32> to vector<8xf32>
    %280 = vector.shape_cast %279 : vector<8xf32> to vector<8x1xf32>
    %cst_95 = arith.constant 3.200000e+01 : f32
    %281 = vector.broadcast %cst_95 : f32 to vector<8x1xf32>
    %282 = arith.divf %280, %281 : vector<8x1xf32>
    %283 = vector.broadcast %275 : vector<8x1xf32> to vector<8x32xf32>
    %284 = arith.subf %271, %283 : vector<8x32xf32>
    %cst_96 = arith.constant 9.99999974E-6 : f32
    %285 = vector.broadcast %cst_96 : f32 to vector<8x1xf32>
    %286 = arith.addf %282, %285 : vector<8x1xf32>
    %287 = math.rsqrt %286 : vector<8x1xf32>
    %288 = vector.broadcast %287 : vector<8x1xf32> to vector<8x32xf32>
    %289 = arith.mulf %284, %288 : vector<8x32xf32>
    %c0_97 = arith.constant 0 : index
    %c0_98 = arith.constant 0 : index
    %290 = vector.load %arg14[%c0_97, %c0_98] : memref<1x32xf32, #tpu.memory_space<vmem>>, vector<1x32xf32>
    %291 = vector.broadcast %290 : vector<1x32xf32> to vector<8x32xf32>
    %292 = arith.mulf %289, %291 : vector<8x32xf32>
    %c0_99 = arith.constant 0 : index
    %c0_100 = arith.constant 0 : index
    %293 = vector.load %arg15[%c0_99, %c0_100] : memref<1x32xf32, #tpu.memory_space<vmem>>, vector<1x32xf32>
    %294 = vector.broadcast %293 : vector<1x32xf32> to vector<8x32xf32>
    %295 = arith.addf %292, %294 : vector<8x32xf32>
    %296 = vector.shape_cast %295 : vector<8x32xf32> to vector<1x8x32xf32>
    %c0_101 = arith.constant 0 : index
    %c0_102 = arith.constant 0 : index
    %c0_103 = arith.constant 0 : index
    %297 = vector.load %arg16[%c0_101, %c0_102, %c0_103] : memref<1x8x32xf32, #tpu.memory_space<vmem>>, vector<1x8x32xf32>
    tpu.vector_store %arg16[%c0_101, %c0_102, %c0_103], %296 {strides = array<i32>} : memref<1x8x32xf32, #tpu.memory_space<vmem>>, vector<1x8x32xf32>,
    return
  }
  func.func @transform_0(%arg0: i32) -> (i32, i32, i32) {
    %c0_i32 = arith.constant 0 : i32
    %c0_i32_0 = arith.constant 0 : i32
    %c0_i32_1 = arith.constant 0 : i32
    return %arg0, %c0_i32, %c0_i32_0 : i32, i32, i32
  }
  func.func @transform_1(%arg0: i32) -> (i32, i32, i32) {
    %c0_i32 = arith.constant 0 : i32
    %c0_i32_0 = arith.constant 0 : i32
    %c0_i32_1 = arith.constant 0 : i32
    %c0_i32_2 = arith.constant 0 : i32
    return %c0_i32, %c0_i32_0, %c0_i32_1 : i32, i32, i32
  }
  func.func @transform_2(%arg0: i32) -> (i32, i32) {
    %c0_i32 = arith.constant 0 : i32
    %c0_i32_0 = arith.constant 0 : i32
    %c0_i32_1 = arith.constant 0 : i32
    return %c0_i32, %c0_i32_0 : i32, i32
  }
  func.func @transform_3(%arg0: i32) -> (i32, i32) {
    %c0_i32 = arith.constant 0 : i32
    %c0_i32_0 = arith.constant 0 : i32
    %c0_i32_1 = arith.constant 0 : i32
    return %c0_i32, %c0_i32_0 : i32, i32
  }
  func.func @transform_4(%arg0: i32) -> (i32, i32) {
    %c0_i32 = arith.constant 0 : i32
    %c0_i32_0 = arith.constant 0 : i32
    %c0_i32_1 = arith.constant 0 : i32
    return %c0_i32, %c0_i32_0 : i32, i32
  }
  func.func @transform_5(%arg0: i32) -> (i32, i32) {
    %c0_i32 = arith.constant 0 : i32
    %c0_i32_0 = arith.constant 0 : i32
    %c0_i32_1 = arith.constant 0 : i32
    return %c0_i32, %c0_i32_0 : i32, i32
  }
  func.func @transform_6(%arg0: i32) -> (i32, i32) {
    %c0_i32 = arith.constant 0 : i32
    %c0_i32_0 = arith.constant 0 : i32
    %c0_i32_1 = arith.constant 0 : i32
    return %c0_i32, %c0_i32_0 : i32, i32
  }
  func.func @transform_7(%arg0: i32) -> (i32, i32) {
    %c0_i32 = arith.constant 0 : i32
    %c0_i32_0 = arith.constant 0 : i32
    %c0_i32_1 = arith.constant 0 : i32
    return %c0_i32, %c0_i32_0 : i32, i32
  }
  func.func @transform_8(%arg0: i32) -> (i32, i32) {
    %c0_i32 = arith.constant 0 : i32
    %c0_i32_0 = arith.constant 0 : i32
    %c0_i32_1 = arith.constant 0 : i32
    return %c0_i32, %c0_i32_0 : i32, i32
  }
  func.func @transform_9(%arg0: i32) -> (i32, i32) {
    %c0_i32 = arith.constant 0 : i32
    %c0_i32_0 = arith.constant 0 : i32
    %c0_i32_1 = arith.constant 0 : i32
    return %c0_i32, %c0_i32_0 : i32, i32
  }
  func.func @transform_10(%arg0: i32) -> (i32, i32) {
    %c0_i32 = arith.constant 0 : i32
    %c0_i32_0 = arith.constant 0 : i32
    %c0_i32_1 = arith.constant 0 : i32
    return %c0_i32, %c0_i32_0 : i32, i32
  }
  func.func @transform_11(%arg0: i32) -> (i32, i32) {
    %c0_i32 = arith.constant 0 : i32
    %c0_i32_0 = arith.constant 0 : i32
    %c0_i32_1 = arith.constant 0 : i32
    return %c0_i32, %c0_i32_0 : i32, i32
  }
  func.func @transform_12(%arg0: i32) -> (i32, i32) {
    %c0_i32 = arith.constant 0 : i32
    %c0_i32_0 = arith.constant 0 : i32
    %c0_i32_1 = arith.constant 0 : i32
    return %c0_i32, %c0_i32_0 : i32, i32
  }
  func.func @transform_13(%arg0: i32) -> (i32, i32) {
    %c0_i32 = arith.constant 0 : i32
    %c0_i32_0 = arith.constant 0 : i32
    %c0_i32_1 = arith.constant 0 : i32
    return %c0_i32, %c0_i32_0 : i32, i32
  }
  func.func @transform_14(%arg0: i32) -> (i32, i32) {
    %c0_i32 = arith.constant 0 : i32
    %c0_i32_0 = arith.constant 0 : i32
    %c0_i32_1 = arith.constant 0 : i32
    return %c0_i32, %c0_i32_0 : i32, i32
  }
  func.func @transform_15(%arg0: i32) -> (i32, i32, i32) {
    %c0_i32 = arith.constant 0 : i32
    %c0_i32_0 = arith.constant 0 : i32
    %c0_i32_1 = arith.constant 0 : i32
    return %arg0, %c0_i32, %c0_i32_0 : i32, i32, i32
  }
  func.func @transform_16(%arg0: i32) -> (i32, i32, i32) {
    %c0_i32 = arith.constant 0 : i32
    %c0_i32_0 = arith.constant 0 : i32
    %c0_i32_1 = arith.constant 0 : i32
    return %arg0, %c0_i32, %c0_i32_0 : i32, i32, i32
  }
}

</mosaic_0001>

<llo_original>
// kernel: tpu_custom_call.1
$region0: #{tpu_custom_call.1}
  #allocation0 [shape = 'u32[]', space=smem, size = 0x4, offset = 0x4, fixed_abs, tag = 'smem constant byte address 0x4 - core index']
  #allocation1 [shape = 'u32[144,128]{1,0:T(1,128)}', space=vmem, size = 0x12000, scoped, tag = 'internal scratch']
  #allocation2 [shape = 'bf16[8,32]{1,0:T(8,128)(2,1)}', space=vmem, size = 0x800, scoped, tag = 'scratch operand']
  %s0 = inlined_call_operand.vmem [shape: f32[2,8,32], index: 0, kind: input, shape index: {}]
  %s1 = inlined_call_operand.vmem [shape: bf16[4,8,8], index: 1, kind: input, shape index: {}]
  %s2 = inlined_call_operand.vmem [shape: bf16[8,32], index: 2, kind: input, shape index: {}]
  %s3 = inlined_call_operand.vmem [shape: bf16[32,96], index: 3, kind: input, shape index: {}]
  %s4 = inlined_call_operand.vmem [shape: f32[1,96], index: 4, kind: input, shape index: {}]
  %s5 = inlined_call_operand.vmem [shape: bf16[32,32], index: 5, kind: input, shape index: {}]
  %s6 = inlined_call_operand.vmem [shape: f32[1,32], index: 6, kind: input, shape index: {}]
  %s7 = inlined_call_operand.vmem [shape: f32[1,32], index: 7, kind: input, shape index: {}]
  %s8 = inlined_call_operand.vmem [shape: f32[1,32], index: 8, kind: input, shape index: {}]
  %s9 = inlined_call_operand.vmem [shape: bf16[32,128], index: 9, kind: input, shape index: {}]
  %s10 = inlined_call_operand.vmem [shape: f32[1,128], index: 10, kind: input, shape index: {}]
  %s11 = inlined_call_operand.vmem [shape: bf16[128,32], index: 11, kind: input, shape index: {}]
  %s12 = inlined_call_operand.vmem [shape: f32[1,32], index: 12, kind: input, shape index: {}]
  %s13 = inlined_call_operand.vmem [shape: f32[1,32], index: 13, kind: input, shape index: {}]
  %s14 = inlined_call_operand.vmem [shape: f32[1,32], index: 14, kind: input, shape index: {}]
  %s15 = inlined_call_operand.hbm [shape: f32[2,8,32], index: 15, kind: output, shape index: {0}]
  %s16 = inlined_call_operand.vmem [shape: f32[2,8,1], index: 16, kind: output, shape index: {1}]
  %17 = xla_tuple %s15, %s16
  %s18 = sld [smem:[#allocation0]]
  $region101: #{tpu_custom_call.1} parent=0
    _
  %s20 = ssub.s32 1, %s18
  %s21 = scalar_select 0, %s20, %s18
  $region1: #{tpu_custom_call.1} parent=0
    #allocation3 [shape = 'u8[8192]{0}', space=vmem, size = 0x2000, scoped, tag = 'output window, operand 0']
    #allocation4 [shape = 's32[2]{0}', space=sflag, size = 0x8, scoped, tag = 'scoped memory for tpu_custom_call.1']
    %22 = vsyncpa [#allocation4], 0
    %s23 = scalar_lea.sflag [#allocation4], 1
    %24 = vsyncpa %s23, 0
    loop: start=0, step=1, limit=4
    $region2: #{tpu_custom_call.1} parent=1 // loop_pre_header
      _
    $region3: #{tpu_custom_call.1} parent=1 // loop_header
      %s26 = sphi 0, %s30
      %p27 = scmp.ge.s32.totalorder %s26, 4
      %s36 = sphi 0, %s38
      %s39 = sphi 0, %s36
      %s40 = sphi 0, %s39
      %s56 = sphi 0, %s40
      %s60 = sphi 0, %s60
      %s62 = sphi 0, %s60
      %s63 = sphi 0, %s62
      %s77 = sphi 0, %s63
      %s81 = sphi 0, %s81
      %s83 = sphi 0, %s81
      %s84 = sphi 0, %s83
      %s98 = sphi 0, %s84
      %s102 = sphi 0, %s102
      %s104 = sphi 0, %s102
      %s105 = sphi 0, %s104
      %s119 = sphi 0, %s105
      %s123 = sphi 0, %s123
      %s125 = sphi 0, %s123
      %s126 = sphi 0, %s125
      %s140 = sphi 0, %s126
      %s144 = sphi 0, %s144
      %s146 = sphi 0, %s144
      %s147 = sphi 0, %s146
      %s161 = sphi 0, %s147
      %s165 = sphi 0, %s165
      %s167 = sphi 0, %s165
      %s168 = sphi 0, %s167
      %s182 = sphi 0, %s168
      %s186 = sphi 0, %s186
      %s188 = sphi 0, %s186
      %s189 = sphi 0, %s188
      %s203 = sphi 0, %s189
      %s207 = sphi 0, %s207
      %s209 = sphi 0, %s207
      %s210 = sphi 0, %s209
      %s224 = sphi 0, %s210
      %s228 = sphi 0, %s228
      %s230 = sphi 0, %s228
      %s231 = sphi 0, %s230
      %s245 = sphi 0, %s231
      %s249 = sphi 0, %s249
      %s251 = sphi 0, %s249
      %s252 = sphi 0, %s251
      %s266 = sphi 0, %s252
      %s270 = sphi 0, %s270
      %s272 = sphi 0, %s270
      %s273 = sphi 0, %s272
      %s287 = sphi 0, %s273
      %s291 = sphi 0, %s291
      %s293 = sphi 0, %s291
      %s294 = sphi 0, %s293
      %s308 = sphi 0, %s294
      %s312 = sphi 0, %s312
      %s314 = sphi 0, %s312
      %s315 = sphi 0, %s314
      %s329 = sphi 0, %s315
      %s333 = sphi 0, %s333
      %s335 = sphi 0, %s333
      %s336 = sphi 0, %s335
      %s350 = sphi 0, %s336
      %s356 = sphi 0, %s358
      %s359 = sphi 0, %s356
      %s360 = sphi 0, %s359
      %s376 = sphi 0, %s360
      %s382 = sphi 0, %s384
      %s385 = sphi 0, %s382
      %s386 = sphi 0, %s385
      %s402 = sphi 0, %s386
    $region4: #{tpu_custom_call.1} parent=1 // loop_header_branch
      %29 = sbr.rel (%p27) target = $region8
    $region5: #{tpu_custom_call.1} parent=1 // loop_body
      %s31 = ssub.s32 %s26, 1
      %s32 = ssub.s32 %s26, 2
      %s33 = sadd.s32 %s26, 1
      %s34 = ssub.s32 %s26, %s33
      %p35 = scmp.eq.s32.totalorder %s34, 0
      %s37 = sadd.s32 %s36, 1
      %s38 = scalar_select %p35, %s36, %s37
      %p41 = pneg %p35
      %p42 = scmp.eq.s32.totalorder %s26, 1
      %p43 = por %p41, %p42
      %p44 = scmp.ne.s32.totalorder %s36, %s39
      %p45 = scmp.eq.s32.totalorder %s26, 0
      %p46 = por %p44, %p45
      %p47 = scmp.ne.s32.totalorder %s36, %s39
      %p48 = scmp.eq.s32.totalorder %s31, 1
      %p49 = por %p47, %p48
      %p50 = scmp.ne.s32.totalorder %s39, %s40
      %p51 = scmp.eq.s32.totalorder %s31, 0
      %p52 = por %p50, %p51
      %p53 = scmp.ne.s32.totalorder %s39, %s40
      %p54 = scmp.eq.s32.totalorder %s32, 1
      %p55 = por %p53, %p54
      %p57 = scmp.ne.s32.totalorder %s40, %s56
      %p58 = scmp.eq.s32.totalorder %s32, 0
      %p59 = por %p57, %p58
      %s61 = sadd.s32 %s60, 1
      %p64 = scmp.eq.s32.totalorder %s26, 1
      %p65 = scmp.ne.s32.totalorder %s60, %s62
      %p66 = scmp.eq.s32.totalorder %s26, 0
      %p67 = por %p65, %p66
      %p68 = scmp.ne.s32.totalorder %s60, %s62
      %p69 = scmp.eq.s32.totalorder %s31, 1
      %p70 = por %p68, %p69
      %p71 = scmp.ne.s32.totalorder %s62, %s63
      %p72 = scmp.eq.s32.totalorder %s31, 0
      %p73 = por %p71, %p72
      %p74 = scmp.ne.s32.totalorder %s62, %s63
      %p75 = scmp.eq.s32.totalorder %s32, 1
      %p76 = por %p74, %p75
      %p78 = scmp.ne.s32.totalorder %s63, %s77
      %p79 = scmp.eq.s32.totalorder %s32, 0
      %p80 = por %p78, %p79
      %s82 = sadd.s32 %s81, 1
      %p85 = scmp.eq.s32.totalorder %s26, 1
      %p86 = scmp.ne.s32.totalorder %s81, %s83
      %p87 = scmp.eq.s32.totalorder %s26, 0
      %p88 = por %p86, %p87
      %p89 = scmp.ne.s32.totalorder %s81, %s83
      %p90 = scmp.eq.s32.totalorder %s31, 1
      %p91 = por %p89, %p90
      %p92 = scmp.ne.s32.totalorder %s83, %s84
      %p93 = scmp.eq.s32.totalorder %s31, 0
      %p94 = por %p92, %p93
      %p95 = scmp.ne.s32.totalorder %s83, %s84
      %p96 = scmp.eq.s32.totalorder %s32, 1
      %p97 = por %p95, %p96
      %p99 = scmp.ne.s32.totalorder %s84, %s98
      %p100 = scmp.eq.s32.totalorder %s32, 0
      %p101 = por %p99, %p100
      %s103 = sadd.s32 %s102, 1
      %p106 = scmp.eq.s32.totalorder %s26, 1
      %p107 = scmp.ne.s32.totalorder %s102, %s104
      %p108 = scmp.eq.s32.totalorder %s26, 0
      %p109 = por %p107, %p108
      %p110 = scmp.ne.s32.totalorder %s102, %s104
      %p111 = scmp.eq.s32.totalorder %s31, 1
      %p112 = por %p110, %p111
      %p113 = scmp.ne.s32.totalorder %s104, %s105
      %p114 = scmp.eq.s32.totalorder %s31, 0
      %p115 = por %p113, %p114
      %p116 = scmp.ne.s32.totalorder %s104, %s105
      %p117 = scmp.eq.s32.totalorder %s32, 1
      %p118 = por %p116, %p117
      %p120 = scmp.ne.s32.totalorder %s105, %s119
      %p121 = scmp.eq.s32.totalorder %s32, 0
      %p122 = por %p120, %p121
      %s124 = sadd.s32 %s123, 1
      %p127 = scmp.eq.s32.totalorder %s26, 1
      %p128 = scmp.ne.s32.totalorder %s123, %s125
      %p129 = scmp.eq.s32.totalorder %s26, 0
      %p130 = por %p128, %p129
      %p131 = scmp.ne.s32.totalorder %s123, %s125
      %p132 = scmp.eq.s32.totalorder %s31, 1
      %p133 = por %p131, %p132
      %p134 = scmp.ne.s32.totalorder %s125, %s126
      %p135 = scmp.eq.s32.totalorder %s31, 0
      %p136 = por %p134, %p135
      %p137 = scmp.ne.s32.totalorder %s125, %s126
      %p138 = scmp.eq.s32.totalorder %s32, 1
      %p139 = por %p137, %p138
      %p141 = scmp.ne.s32.totalorder %s126, %s140
      %p142 = scmp.eq.s32.totalorder %s32, 0
      %p143 = por %p141, %p142
      %s145 = sadd.s32 %s144, 1
      %p148 = scmp.eq.s32.totalorder %s26, 1
      %p149 = scmp.ne.s32.totalorder %s144, %s146
      %p150 = scmp.eq.s32.totalorder %s26, 0
      %p151 = por %p149, %p150
      %p152 = scmp.ne.s32.totalorder %s144, %s146
      %p153 = scmp.eq.s32.totalorder %s31, 1
      %p154 = por %p152, %p153
      %p155 = scmp.ne.s32.totalorder %s146, %s147
      %p156 = scmp.eq.s32.totalorder %s31, 0
      %p157 = por %p155, %p156
      %p158 = scmp.ne.s32.totalorder %s146, %s147
      %p159 = scmp.eq.s32.totalorder %s32, 1
      %p160 = por %p158, %p159
      %p162 = scmp.ne.s32.totalorder %s147, %s161
      %p163 = scmp.eq.s32.totalorder %s32, 0
      %p164 = por %p162, %p163
      %s166 = sadd.s32 %s165, 1
      %p169 = scmp.eq.s32.totalorder %s26, 1
      %p170 = scmp.ne.s32.totalorder %s165, %s167
      %p171 = scmp.eq.s32.totalorder %s26, 0
      %p172 = por %p170, %p171
      %p173 = scmp.ne.s32.totalorder %s165, %s167
      %p174 = scmp.eq.s32.totalorder %s31, 1
      %p175 = por %p173, %p174
      %p176 = scmp.ne.s32.totalorder %s167, %s168
      %p177 = scmp.eq.s32.totalorder %s31, 0
      %p178 = por %p176, %p177
      %p179 = scmp.ne.s32.totalorder %s167, %s168
      %p180 = scmp.eq.s32.totalorder %s32, 1
      %p181 = por %p179, %p180
      %p183 = scmp.ne.s32.totalorder %s168, %s182
      %p184 = scmp.eq.s32.totalorder %s32, 0
      %p185 = por %p183, %p184
      %s187 = sadd.s32 %s186, 1
      %p190 = scmp.eq.s32.totalorder %s26, 1
      %p191 = scmp.ne.s32.totalorder %s186, %s188
      %p192 = scmp.eq.s32.totalorder %s26, 0
      %p193 = por %p191, %p192
      %p194 = scmp.ne.s32.totalorder %s186, %s188
      %p195 = scmp.eq.s32.totalorder %s31, 1
      %p196 = por %p194, %p195
      %p197 = scmp.ne.s32.totalorder %s188, %s189
      %p198 = scmp.eq.s32.totalorder %s31, 0
      %p199 = por %p197, %p198
      %p200 = scmp.ne.s32.totalorder %s188, %s189
      %p201 = scmp.eq.s32.totalorder %s32, 1
      %p202 = por %p200, %p201
      %p204 = scmp.ne.s32.totalorder %s189, %s203
      %p205 = scmp.eq.s32.totalorder %s32, 0
      %p206 = por %p204, %p205
      %s208 = sadd.s32 %s207, 1
      %p211 = scmp.eq.s32.totalorder %s26, 1
      %p212 = scmp.ne.s32.totalorder %s207, %s209
      %p213 = scmp.eq.s32.totalorder %s26, 0
      %p214 = por %p212, %p213
      %p215 = scmp.ne.s32.totalorder %s207, %s209
      %p216 = scmp.eq.s32.totalorder %s31, 1
      %p217 = por %p215, %p216
      %p218 = scmp.ne.s32.totalorder %s209, %s210
      %p219 = scmp.eq.s32.totalorder %s31, 0
      %p220 = por %p218, %p219
      %p221 = scmp.ne.s32.totalorder %s209, %s210
      %p222 = scmp.eq.s32.totalorder %s32, 1
      %p223 = por %p221, %p222
      %p225 = scmp.ne.s32.totalorder %s210, %s224
      %p226 = scmp.eq.s32.totalorder %s32, 0
      %p227 = por %p225, %p226
      %s229 = sadd.s32 %s228, 1
      %p232 = scmp.eq.s32.totalorder %s26, 1
      %p233 = scmp.ne.s32.totalorder %s228, %s230
      %p234 = scmp.eq.s32.totalorder %s26, 0
      %p235 = por %p233, %p234
      %p236 = scmp.ne.s32.totalorder %s228, %s230
      %p237 = scmp.eq.s32.totalorder %s31, 1
      %p238 = por %p236, %p237
      %p239 = scmp.ne.s32.totalorder %s230, %s231
      %p240 = scmp.eq.s32.totalorder %s31, 0
      %p241 = por %p239, %p240
      %p242 = scmp.ne.s32.totalorder %s230, %s231
      %p243 = scmp.eq.s32.totalorder %s32, 1
      %p244 = por %p242, %p243
      %p246 = scmp.ne.s32.totalorder %s231, %s245
      %p247 = scmp.eq.s32.totalorder %s32, 0
      %p248 = por %p246, %p247
      %s250 = sadd.s32 %s249, 1
      %p253 = scmp.eq.s32.totalorder %s26, 1
      %p254 = scmp.ne.s32.totalorder %s249, %s251
      %p255 = scmp.eq.s32.totalorder %s26, 0
      %p256 = por %p254, %p255
      %p257 = scmp.ne.s32.totalorder %s249, %s251
      %p258 = scmp.eq.s32.totalorder %s31, 1
      %p259 = por %p257, %p258
      %p260 = scmp.ne.s32.totalorder %s251, %s252
      %p261 = scmp.eq.s32.totalorder %s31, 0
      %p262 = por %p260, %p261
      %p263 = scmp.ne.s32.totalorder %s251, %s252
      %p264 = scmp.eq.s32.totalorder %s32, 1
      %p265 = por %p263, %p264
      %p267 = scmp.ne.s32.totalorder %s252, %s266
      %p268 = scmp.eq.s32.totalorder %s32, 0
      %p269 = por %p267, %p268
      %s271 = sadd.s32 %s270, 1
      %p274 = scmp.eq.s32.totalorder %s26, 1
      %p275 = scmp.ne.s32.totalorder %s270, %s272
      %p276 = scmp.eq.s32.totalorder %s26, 0
      %p277 = por %p275, %p276
      %p278 = scmp.ne.s32.totalorder %s270, %s272
      %p279 = scmp.eq.s32.totalorder %s31, 1
      %p280 = por %p278, %p279
      %p281 = scmp.ne.s32.totalorder %s272, %s273
      %p282 = scmp.eq.s32.totalorder %s31, 0
      %p283 = por %p281, %p282
      %p284 = scmp.ne.s32.totalorder %s272, %s273
      %p285 = scmp.eq.s32.totalorder %s32, 1
      %p286 = por %p284, %p285
      %p288 = scmp.ne.s32.totalorder %s273, %s287
      %p289 = scmp.eq.s32.totalorder %s32, 0
      %p290 = por %p288, %p289
      %s292 = sadd.s32 %s291, 1
      %p295 = scmp.eq.s32.totalorder %s26, 1
      %p296 = scmp.ne.s32.totalorder %s291, %s293
      %p297 = scmp.eq.s32.totalorder %s26, 0
      %p298 = por %p296, %p297
      %p299 = scmp.ne.s32.totalorder %s291, %s293
      %p300 = scmp.eq.s32.totalorder %s31, 1
      %p301 = por %p299, %p300
      %p302 = scmp.ne.s32.totalorder %s293, %s294
      %p303 = scmp.eq.s32.totalorder %s31, 0
      %p304 = por %p302, %p303
      %p305 = scmp.ne.s32.totalorder %s293, %s294
      %p306 = scmp.eq.s32.totalorder %s32, 1
      %p307 = por %p305, %p306
      %p309 = scmp.ne.s32.totalorder %s294, %s308
      %p310 = scmp.eq.s32.totalorder %s32, 0
      %p311 = por %p309, %p310
      %s313 = sadd.s32 %s312, 1
      %p316 = scmp.eq.s32.totalorder %s26, 1
      %p317 = scmp.ne.s32.totalorder %s312, %s314
      %p318 = scmp.eq.s32.totalorder %s26, 0
      %p319 = por %p317, %p318
      %p320 = scmp.ne.s32.totalorder %s312, %s314
      %p321 = scmp.eq.s32.totalorder %s31, 1
      %p322 = por %p320, %p321
      %p323 = scmp.ne.s32.totalorder %s314, %s315
      %p324 = scmp.eq.s32.totalorder %s31, 0
      %p325 = por %p323, %p324
      %p326 = scmp.ne.s32.totalorder %s314, %s315
      %p327 = scmp.eq.s32.totalorder %s32, 1
      %p328 = por %p326, %p327
      %p330 = scmp.ne.s32.totalorder %s315, %s329
      %p331 = scmp.eq.s32.totalorder %s32, 0
      %p332 = por %p330, %p331
      %s334 = sadd.s32 %s333, 1
      %p337 = scmp.eq.s32.totalorder %s26, 1
      %p338 = scmp.ne.s32.totalorder %s333, %s335
      %p339 = scmp.eq.s32.totalorder %s26, 0
      %p340 = por %p338, %p339
      %p341 = scmp.ne.s32.totalorder %s333, %s335
      %p342 = scmp.eq.s32.totalorder %s31, 1
      %p343 = por %p341, %p342
      %p344 = scmp.ne.s32.totalorder %s335, %s336
      %p345 = scmp.eq.s32.totalorder %s31, 0
      %p346 = por %p344, %p345
      %p347 = scmp.ne.s32.totalorder %s335, %s336
      %p348 = scmp.eq.s32.totalorder %s32, 1
      %p349 = por %p347, %p348
      %p351 = scmp.ne.s32.totalorder %s336, %s350
      %p352 = scmp.eq.s32.totalorder %s32, 0
      %p353 = por %p351, %p352
      %s354 = ssub.s32 %s26, %s33
      %p355 = scmp.eq.s32.totalorder %s354, 0
      %s357 = sadd.s32 %s356, 1
      %s358 = scalar_select %p355, %s356, %s357
      %p361 = pneg %p355
      %p362 = scmp.eq.s32.totalorder %s26, 1
      %p363 = por %p361, %p362
      %p364 = scmp.ne.s32.totalorder %s356, %s359
      %p365 = scmp.eq.s32.totalorder %s26, 0
      %p366 = por %p364, %p365
      %p367 = scmp.ne.s32.totalorder %s356, %s359
      %p368 = scmp.eq.s32.totalorder %s31, 1
      %p369 = por %p367, %p368
      %p370 = scmp.ne.s32.totalorder %s359, %s360
      %p371 = scmp.eq.s32.totalorder %s31, 0
      %p372 = por %p370, %p371
      %p373 = scmp.ne.s32.totalorder %s359, %s360
      %p374 = scmp.eq.s32.totalorder %s32, 1
      %p375 = por %p373, %p374
      %p377 = scmp.ne.s32.totalorder %s360, %s376
      %p378 = scmp.eq.s32.totalorder %s32, 0
      %p379 = por %p377, %p378
      %s380 = ssub.s32 %s26, %s33
      %p381 = scmp.eq.s32.totalorder %s380, 0
      %s383 = sadd.s32 %s382, 1
      %s384 = scalar_select %p381, %s382, %s383
      %p387 = pneg %p381
      %p388 = scmp.eq.s32.totalorder %s26, 1
      %p389 = por %p387, %p388
      %p390 = scmp.ne.s32.totalorder %s382, %s385
      %p391 = scmp.eq.s32.totalorder %s26, 0
      %p392 = por %p390, %p391
      %p393 = scmp.ne.s32.totalorder %s382, %s385
      %p394 = scmp.eq.s32.totalorder %s31, 1
      %p395 = por %p393, %p394
      %p396 = scmp.ne.s32.totalorder %s385, %s386
      %p397 = scmp.eq.s32.totalorder %s31, 0
      %p398 = por %p396, %p397
      %p399 = scmp.ne.s32.totalorder %s385, %s386
      %p400 = scmp.eq.s32.totalorder %s32, 1
      %p401 = por %p399, %p400
      %p403 = scmp.ne.s32.totalorder %s386, %s402
      %p404 = scmp.eq.s32.totalorder %s32, 0
      %p405 = por %p403, %p404
      %p406 = scmp.le.s32.totalorder 1, %s26
      %p407 = scmp.lt.s32.totalorder %s26, 3
      %p408 = pnand %p406, %p407
      %p409 = pneg %p408
      // Predicated region
      $region9: #{tpu_custom_call.1} parent=5 // pred_check
        _
      $region10: #{tpu_custom_call.1} parent=5 // pred_check_branch
        %411 = sbr.rel (%p408) target = $region12
      $region11: #{tpu_custom_call.1} parent=5 // pred_region
        %s412 = ssub.s32 %s26, 1
        // Predicated region
        $region13: #{tpu_custom_call.1} parent=11 // pred_check
          %p413 = pneg %p73
        $region14: #{tpu_custom_call.1} parent=11 // pred_check_branch
          %415 = sbr.rel (%p413) target = $region16
        $region15: #{tpu_custom_call.1} parent=11 // pred_region
          _
        $region16: #{tpu_custom_call.1} parent=11 // pred_fallthru
          _
        // Predicated region
        $region17: #{tpu_custom_call.1} parent=11 // pred_check
          %p416 = pneg %p94
        $region18: #{tpu_custom_call.1} parent=11 // pred_check_branch
          %418 = sbr.rel (%p416) target = $region20
        $region19: #{tpu_custom_call.1} parent=11 // pred_region
          _
        $region20: #{tpu_custom_call.1} parent=11 // pred_fallthru
          _
        // Predicated region
        $region21: #{tpu_custom_call.1} parent=11 // pred_check
          %p419 = pneg %p115
        $region22: #{tpu_custom_call.1} parent=11 // pred_check_branch
          %421 = sbr.rel (%p419) target = $region24
        $region23: #{tpu_custom_call.1} parent=11 // pred_region
          _
        $region24: #{tpu_custom_call.1} parent=11 // pred_fallthru
          _
        // Predicated region
        $region25: #{tpu_custom_call.1} parent=11 // pred_check
          %p422 = pneg %p136
        $region26: #{tpu_custom_call.1} parent=11 // pred_check_branch
          %424 = sbr.rel (%p422) target = $region28
        $region27: #{tpu_custom_call.1} parent=11 // pred_region
          _
        $region28: #{tpu_custom_call.1} parent=11 // pred_fallthru
          _
        // Predicated region
        $region29: #{tpu_custom_call.1} parent=11 // pred_check
          %p425 = pneg %p157
        $region30: #{tpu_custom_call.1} parent=11 // pred_check_branch
          %427 = sbr.rel (%p425) target = $region32
        $region31: #{tpu_custom_call.1} parent=11 // pred_region
          _
        $region32: #{tpu_custom_call.1} parent=11 // pred_fallthru
          _
        // Predicated region
        $region33: #{tpu_custom_call.1} parent=11 // pred_check
          %p428 = pneg %p178
        $region34: #{tpu_custom_call.1} parent=11 // pred_check_branch
          %430 = sbr.rel (%p428) target = $region36
        $region35: #{tpu_custom_call.1} parent=11 // pred_region
          _
        $region36: #{tpu_custom_call.1} parent=11 // pred_fallthru
          _
        // Predicated region
        $region37: #{tpu_custom_call.1} parent=11 // pred_check
          %p431 = pneg %p199
        $region38: #{tpu_custom_call.1} parent=11 // pred_check_branch
          %433 = sbr.rel (%p431) target = $region40
        $region39: #{tpu_custom_call.1} parent=11 // pred_region
          _
        $region40: #{tpu_custom_call.1} parent=11 // pred_fallthru
          _
        // Predicated region
        $region41: #{tpu_custom_call.1} parent=11 // pred_check
          %p434 = pneg %p220
        $region42: #{tpu_custom_call.1} parent=11 // pred_check_branch
          %436 = sbr.rel (%p434) target = $region44
        $region43: #{tpu_custom_call.1} parent=11 // pred_region
          _
        $region44: #{tpu_custom_call.1} parent=11 // pred_fallthru
          _
        // Predicated region
        $region45: #{tpu_custom_call.1} parent=11 // pred_check
          %p437 = pneg %p241
        $region46: #{tpu_custom_call.1} parent=11 // pred_check_branch
          %439 = sbr.rel (%p437) target = $region48
        $region47: #{tpu_custom_call.1} parent=11 // pred_region
          _
        $region48: #{tpu_custom_call.1} parent=11 // pred_fallthru
          _
        // Predicated region
        $region49: #{tpu_custom_call.1} parent=11 // pred_check
          %p440 = pneg %p262
        $region50: #{tpu_custom_call.1} parent=11 // pred_check_branch
          %442 = sbr.rel (%p440) target = $region52
        $region51: #{tpu_custom_call.1} parent=11 // pred_region
          _
        $region52: #{tpu_custom_call.1} parent=11 // pred_fallthru
          _
        // Predicated region
        $region53: #{tpu_custom_call.1} parent=11 // pred_check
          %p443 = pneg %p283
        $region54: #{tpu_custom_call.1} parent=11 // pred_check_branch
          %445 = sbr.rel (%p443) target = $region56
        $region55: #{tpu_custom_call.1} parent=11 // pred_region
          _
        $region56: #{tpu_custom_call.1} parent=11 // pred_fallthru
          _
        // Predicated region
        $region57: #{tpu_custom_call.1} parent=11 // pred_check
          %p446 = pneg %p304
        $region58: #{tpu_custom_call.1} parent=11 // pred_check_branch
          %448 = sbr.rel (%p446) target = $region60
        $region59: #{tpu_custom_call.1} parent=11 // pred_region
          _
        $region60: #{tpu_custom_call.1} parent=11 // pred_fallthru
          _
        // Predicated region
        $region61: #{tpu_custom_call.1} parent=11 // pred_check
          %p449 = pneg %p325
        $region62: #{tpu_custom_call.1} parent=11 // pred_check_branch
          %451 = sbr.rel (%p449) target = $region64
        $region63: #{tpu_custom_call.1} parent=11 // pred_region
          _
        $region64: #{tpu_custom_call.1} parent=11 // pred_fallthru
          _
        // Predicated region
        $region65: #{tpu_custom_call.1} parent=11 // pred_check
          %p452 = pneg %p346
        $region66: #{tpu_custom_call.1} parent=11 // pred_check_branch
          %454 = sbr.rel (%p452) target = $region68
        $region67: #{tpu_custom_call.1} parent=11 // pred_region
          _
        $region68: #{tpu_custom_call.1} parent=11 // pred_fallthru
          _
      $region12: #{tpu_custom_call.1} parent=5 // pred_fallthru
        _
      %p455 = scmp.lt.s32.totalorder %s26, 2
      // Predicated region
      $region69: #{tpu_custom_call.1} parent=5 // pred_check
        %p456 = pneg %p455
      $region70: #{tpu_custom_call.1} parent=5 // pred_check_branch
        %458 = sbr.rel (%p456) target = $region72
      $region71: #{tpu_custom_call.1} parent=5 // pred_region
        // Predicated region
        $region73: #{tpu_custom_call.1} parent=71 // pred_check
          %p459 = pneg %p46
        $region74: #{tpu_custom_call.1} parent=71 // pred_check_branch
          %461 = sbr.rel (%p459) target = $region76
        $region75: #{tpu_custom_call.1} parent=71 // pred_region
          %p462 = scmp.lt.s32.totalorder %s26, 1
          %s463 = scalar_select %p462, %s26, 1
          %s464 = smul.addr %s463, 8
          %s465 = scalar_lea.vmem %s0, %s464
        $region76: #{tpu_custom_call.1} parent=71 // pred_fallthru
          _
      $region72: #{tpu_custom_call.1} parent=5 // pred_fallthru
        _
      %p466 = scmp.le.s32.totalorder 1, %s26
      %p467 = scmp.lt.s32.totalorder %s26, 3
      %p468 = pnand %p466, %p467
      %p469 = pneg %p468
      // Predicated region
      $region77: #{tpu_custom_call.1} parent=5 // pred_check
        _
      $region78: #{tpu_custom_call.1} parent=5 // pred_check_branch
        %471 = sbr.rel (%p468) target = $region80
      $region79: #{tpu_custom_call.1} parent=5 // pred_region
        %s472 = ssub.s32 %s26, 1
        %p473 = scmp.lt.s32.totalorder %s31, 1
        %s474 = scalar_select %p473, %s31, 1
        %s475 = smul.addr %s474, 8
        %s476 = scalar_lea.vmem %s0, %s475
        %p477 = pneg %p52
        %p478 = pneg %p49
        %p479 = pneg %p73
        %p480 = pneg %p70
        %p481 = pneg %p94
        %p482 = pneg %p91
        %p483 = pneg %p115
        %p484 = pneg %p112
        %p485 = pneg %p136
        %p486 = pneg %p133
        %p487 = pneg %p157
        %p488 = pneg %p154
        %p489 = pneg %p178
        %p490 = pneg %p175
        %p491 = pneg %p199
        %p492 = pneg %p196
        %p493 = pneg %p220
        %p494 = pneg %p217
        %p495 = pneg %p241
        %p496 = pneg %p238
        %p497 = pneg %p262
        %p498 = pneg %p259
        %p499 = pneg %p283
        %p500 = pneg %p280
        %p501 = pneg %p304
        %p502 = pneg %p301
        %p503 = pneg %p325
        %p504 = pneg %p322
        %p505 = pneg %p346
        %p506 = pneg %p343
        %p507 = pneg %p372
        %p508 = pneg %p369
        %s509 = sand.u32 %s359, 1
        %s510 = scalar_lea.sflag [#allocation4], %s509
        %s511 = sand.u32 %s359, 1
        %s512 = smul.addr %s511, 8
        %s513 = scalar_lea.vmem [#allocation3], %s512
        %p514 = pneg %p398
        %p515 = pneg %p395
        %p516 = scmp.lt.s32.totalorder %s31, 1
        %s517 = scalar_select %p516, %s31, 1
        %s518 = smul.addr %s517, 8
        %s519 = scalar_lea.vmem %s16, %s518
        %p520 = scmp.lt.s32.totalorder %s31, 1
        %s521 = scalar_select %p520, %s31, 1
        %s522 = smul.addr %s521, 8
        %s523 = scalar_lea.vmem %s0, %s522
        %p524 = scmp.lt.s32.totalorder %s31, 1
        %s525 = scalar_select %p524, %s31, 1
        %s526 = smul.addr %s525, 8
        %s527 = scalar_lea.vmem %s16, %s526
        %v529 = vld [vmem:[%s523] sm:$0xff]
        %v530 = vpack.c.bf16 %v529, %v529
        %v531 = vld [vmem:[%s3] sm:$0xf]
        %v532 = vld [vmem:[%s3 + $0x4] sm:$0xf]
        %v533 = vld [vmem:[%s3 + $0x8] sm:$0xf]
        %v534 = vld [vmem:[%s3 + $0xc] sm:$0xf]
        %v535 = vld [vmem:[%s4] sm:$0x1]
        %v537 = vlaneseq
        %v538 = vshrl.u32 %v537, 7
        %v539 = vsub.s32 0, %v538
        %v540 = vrot.slane %v535, %v539
        %v546 = vunpack.c.l.b16 %v531
        %v547 = vunpack.c.l.b16 %v532
        %v548 = vunpack.c.l.b16 %v533
        %v549 = vunpack.c.l.b16 %v534
        %v550 = vpack.c.b16 %v547, %v546
        %v551 = vpack.c.b16 %v549, %v548
        %vm554 = vcmask 261120
        %v556 = vsel %vm554, %v530, 0
        %558 = vmatprep.subr.bf16.mxu0 0
        %559 = vmatpush1.bf16.msra.mxu0 %v550
        %560 = vmatprep.subr.bf16.mxu0 0
        %561 = vmatpush1.bf16.msra.mxu0 %v551
        %562 = vmatprep.subr.bf16.mxu0 0
        %563 = vmatpush1.bf16.msra.mxu0 0
        %564 = vmatprep.subr.bf16.mxu0 0
        %565 = vmatpush1.bf16.msra.mxu0 0
        %566 = vmatprep.subr.bf16.mxu0 0
        %567 = vmatpush1.bf16.msra.mxu0 0
        %568 = vmatprep.subr.bf16.mxu0 0
        %569 = vmatpush1.bf16.msra.mxu0 0
        %570 = vmatprep.subr.bf16.mxu0 0
        %571 = vmatpush1.bf16.msra.mxu0 0
        %572 = vmatprep.subr.bf16.mxu0 0
        %573 = vmatpush1.bf16.msra.mxu0 0
        %574 = vmatprep.subr.bf16.mxu0 0
        %575 = vmatpush1.bf16.msra.mxu0 0
        %576 = vmatprep.subr.bf16.mxu0 0
        %577 = vmatpush1.bf16.msra.mxu0 0
        %578 = vmatprep.subr.bf16.mxu0 0
        %579 = vmatpush1.bf16.msra.mxu0 0
        %580 = vmatprep.subr.bf16.mxu0 0
        %581 = vmatpush1.bf16.msra.mxu0 0
        %582 = vmatprep.subr.bf16.mxu0 0
        %583 = vmatpush1.bf16.msra.mxu0 0
        %584 = vmatprep.subr.bf16.mxu0 0
        %585 = vmatpush1.bf16.msra.mxu0 0
        %586 = vmatprep.subr.bf16.mxu0 0
        %587 = vmatpush1.bf16.msra.mxu0 0
        %588 = vmatprep.subr.bf16.mxu0 0
        %589 = vmatpush1.bf16.msra.mxu0 0
        %590 = vmatprep.mubr.bf16.mxu0 0
        %591 = vmatmul.mubr.bf16.gmra.mrb[0].mxu0 %v556
        %v592 = vpop.f32.mrb[0].mxu0
        %v593 = vadd.f32 %v540, %v592
        %v594 = vpop.f32.mrb[0].mxu0
        %v595 = vpop.f32.mrb[0].mxu0
        %v596 = vpop.f32.mrb[0].mxu0
        %597 = vdwg.mxu0
        %v598 = vpack.c.bf16 %v593, %v593
        %v599 = vld [vmem:[%s2] sm:$0xf]
        %601 = vrot.lane.b32.xlu0 %v598, 96
        %v602 = vpop.permute.xlu0 %601
        %vm603 = vcmask 64512
        %v605 = vsel %vm603, %v598, 0
        %v608 = vsel %vm603, %v602, 0
        %610 = vmatprep.subr.bf16.mxu0 0
        %611 = vmatpush1.bf16.xpose.msra.mxu0 %v608
        %612 = vmatprep.subr.bf16.mxu0 0
        %613 = vmatpush1.bf16.xpose.msra.mxu0 0
        %614 = vmatprep.subr.bf16.mxu0 0
        %615 = vmatpush1.bf16.xpose.msra.mxu0 0
        %616 = vmatprep.subr.bf16.mxu0 0
        %617 = vmatpush1.bf16.xpose.msra.mxu0 0
        %618 = vmatprep.subr.bf16.mxu0 0
        %619 = vmatpush1.bf16.xpose.msra.mxu0 0
        %620 = vmatprep.subr.bf16.mxu0 0
        %621 = vmatpush1.bf16.xpose.msra.mxu0 0
        %622 = vmatprep.subr.bf16.mxu0 0
        %623 = vmatpush1.bf16.xpose.msra.mxu0 0
        %624 = vmatprep.subr.bf16.mxu0 0
        %625 = vmatpush1.bf16.xpose.msra.mxu0 0
        %626 = vmatprep.subr.bf16.mxu0 0
        %627 = vmatpush1.bf16.xpose.msra.mxu0 0
        %628 = vmatprep.subr.bf16.mxu0 0
        %629 = vmatpush1.bf16.xpose.msra.mxu0 0
        %630 = vmatprep.subr.bf16.mxu0 0
        %631 = vmatpush1.bf16.xpose.msra.mxu0 0
        %632 = vmatprep.subr.bf16.mxu0 0
        %633 = vmatpush1.bf16.xpose.msra.mxu0 0
        %634 = vmatprep.subr.bf16.mxu0 0
        %635 = vmatpush1.bf16.xpose.msra.mxu0 0
        %636 = vmatprep.subr.bf16.mxu0 0
        %637 = vmatpush1.bf16.xpose.msra.mxu0 0
        %638 = vmatprep.subr.bf16.mxu0 0
        %639 = vmatpush1.bf16.xpose.msra.mxu0 0
        %640 = vmatprep.subr.bf16.mxu0 0
        %641 = vmatpush1.bf16.xpose.msra.mxu0 0
        %642 = vmatprep.mubr.bf16.mxu0 0
        %643 = vmatmul.mubr.bf16.gmra.mrb[0].mxu0 %v605
        %v644 = vpop.f32.mrb[0].mxu0
        %v645 = vadd.f32 0.0, %v644
        %v646 = vpop.f32.mrb[0].mxu0
        %v647 = vpop.f32.mrb[0].mxu0
        %v648 = vpop.f32.mrb[0].mxu0
        %649 = vdwg.mxu0
        %v650 = vsel %vm603, %v645, -inf
        %651 = vmax.xlane.f32.xlu0 %v650
        %v652 = vpop.xlane.xlu0 %651
        %v653 = vld [vmem:[%s1] sm:$0xf]
        %vm654 = vcmask 1043456
        %v656 = vsel %vm654, %v653, 0
        %658 = vmatprep.subr.bf16.mxu0 0
        %659 = vmatpush1.bf16.msra.mxu0 %v656
        %660 = vmatprep.subr.bf16.mxu0 0
        %661 = vmatpush1.bf16.msra.mxu0 0
        %662 = vmatprep.subr.bf16.mxu0 0
        %663 = vmatpush1.bf16.msra.mxu0 0
        %664 = vmatprep.subr.bf16.mxu0 0
        %665 = vmatpush1.bf16.msra.mxu0 0
        %666 = vmatprep.subr.bf16.mxu0 0
        %667 = vmatpush1.bf16.msra.mxu0 0
        %668 = vmatprep.subr.bf16.mxu0 0
        %669 = vmatpush1.bf16.msra.mxu0 0
        %670 = vmatprep.subr.bf16.mxu0 0
        %671 = vmatpush1.bf16.msra.mxu0 0
        %672 = vmatprep.subr.bf16.mxu0 0
        %673 = vmatpush1.bf16.msra.mxu0 0
        %674 = vmatprep.subr.bf16.mxu0 0
        %675 = vmatpush1.bf16.msra.mxu0 0
        %676 = vmatprep.subr.bf16.mxu0 0
        %677 = vmatpush1.bf16.msra.mxu0 0
        %678 = vmatprep.subr.bf16.mxu0 0
        %679 = vmatpush1.bf16.msra.mxu0 0
        %680 = vmatprep.subr.bf16.mxu0 0
        %681 = vmatpush1.bf16.msra.mxu0 0
        %682 = vmatprep.subr.bf16.mxu0 0
        %683 = vmatpush1.bf16.msra.mxu0 0
        %684 = vmatprep.subr.bf16.mxu0 0
        %685 = vmatpush1.bf16.msra.mxu0 0
        %686 = vmatprep.subr.bf16.mxu0 0
        %687 = vmatpush1.bf16.msra.mxu0 0
        %688 = vmatprep.subr.bf16.mxu0 0
        %689 = vmatpush1.bf16.msra.mxu0 0
        %690 = vmatprep.mubr.bf16.mxu0 0
        %691 = vmatmul.mubr.bf16.gmra.mrb[0].mxu0 %v605
        %v692 = vpop.f32.mrb[0].mxu0
        %v693 = vadd.f32 0.0, %v692
        %v694 = vpop.f32.mrb[0].mxu0
        %v695 = vpop.f32.mrb[0].mxu0
        %v696 = vpop.f32.mrb[0].mxu0
        %697 = vdwg.mxu0
        %v698 = vsel %vm603, %v693, -inf
        %699 = vmax.xlane.f32.xlu0 %v698
        %v700 = vpop.xlane.xlu0 %699
        %v701 = vmax.f32 %v652, %v700
        %v702 = vsub.f32 %v645, %v701
        %v703 = vmul.f32 %v702, 1.442695
        %v704 = vpow.pop %v703
        %v705 = vsel %vm603, %v704, 0.0
        %706 = vadd.xlane.f32.xlu0 %v705
        %v707 = vpop.xlane.xlu0 %706
        %v708 = vmul.f32 %v702, %v704
        %v709 = vsel %vm603, %v708, 0.0
        %710 = vadd.xlane.f32.xlu0 %v709
        %v711 = vpop.xlane.xlu0 %710
        %v712 = vsub.f32 %v693, %v701
        %v713 = vmul.f32 %v712, 1.442695
        %v714 = vpow.pop %v713
        %v715 = vsel %vm603, %v714, 0.0
        %716 = vadd.xlane.f32.xlu0 %v715
        %v717 = vpop.xlane.xlu0 %716
        %v718 = vadd.f32 %v707, %v717
        %v719 = vmul.f32 %v712, %v714
        %v720 = vsel %vm603, %v719, 0.0
        %721 = vadd.xlane.f32.xlu0 %v720
        %v722 = vpop.xlane.xlu0 %721
        %v723 = vadd.f32 %v711, %v722
        %v724 = vlog2.pop %v718
        %v725 = vmul.f32 %v724, 0.6931472
        %v726 = vrcp.pop %v718
        %v727 = vmul.f32 %v723, %v726
        %v728 = vsub.f32 %v725, %v727
        %v729 = vrcp.pop %v718
        %v730 = vmul.f32 %v704, %v729
        %v731 = vpack.c.bf16 %v730, %v730
        %v732 = vmul.f32 %v714, %v729
        %v733 = vpack.c.bf16 %v732, %v732
        %v735 = vsel %vm603, %v733, 0
        %v738 = vsel %vm654, %v599, 0
        %740 = vmatprep.subr.bf16.mxu0 0
        %741 = vmatpush1.bf16.msra.mxu0 %v738
        %742 = vmatprep.subr.bf16.mxu0 0
        %743 = vmatpush1.bf16.msra.mxu0 0
        %744 = vmatprep.subr.bf16.mxu0 0
        %745 = vmatpush1.bf16.msra.mxu0 0
        %746 = vmatprep.subr.bf16.mxu0 0
        %747 = vmatpush1.bf16.msra.mxu0 0
        %748 = vmatprep.subr.bf16.mxu0 0
        %749 = vmatpush1.bf16.msra.mxu0 0
        %750 = vmatprep.subr.bf16.mxu0 0
        %751 = vmatpush1.bf16.msra.mxu0 0
        %752 = vmatprep.subr.bf16.mxu0 0
        %753 = vmatpush1.bf16.msra.mxu0 0
        %754 = vmatprep.subr.bf16.mxu0 0
        %755 = vmatpush1.bf16.msra.mxu0 0
        %756 = vmatprep.subr.bf16.mxu0 0
        %757 = vmatpush1.bf16.msra.mxu0 0
        %758 = vmatprep.subr.bf16.mxu0 0
        %759 = vmatpush1.bf16.msra.mxu0 0
        %760 = vmatprep.subr.bf16.mxu0 0
        %761 = vmatpush1.bf16.msra.mxu0 0
        %762 = vmatprep.subr.bf16.mxu0 0
        %763 = vmatpush1.bf16.msra.mxu0 0
        %764 = vmatprep.subr.bf16.mxu0 0
        %765 = vmatpush1.bf16.msra.mxu0 0
        %766 = vmatprep.subr.bf16.mxu0 0
        %767 = vmatpush1.bf16.msra.mxu0 0
        %768 = vmatprep.subr.bf16.mxu0 0
        %769 = vmatpush1.bf16.msra.mxu0 0
        %770 = vmatprep.subr.bf16.mxu0 0
        %771 = vmatpush1.bf16.msra.mxu0 0
        %772 = vmatprep.mubr.bf16.mxu0 0
        %773 = vmatmul.mubr.bf16.gmra.mrb[0].mxu0 %v735
        %v774 = vpop.f32.mrb[0].mxu0
        %v775 = vadd.f32 0.0, %v774
        %v776 = vpop.f32.mrb[0].mxu0
        %v777 = vpop.f32.mrb[0].mxu0
        %v778 = vpop.f32.mrb[0].mxu0
        %779 = vdwg.mxu0
        %780 = vrot.lane.b32.xlu0 %v598, 64
        %v781 = vpop.permute.xlu0 %780
        %v783 = vsel %vm603, %v731, 0
        %v786 = vsel %vm654, %v781, 0
        %788 = vmatprep.subr.bf16.mxu0 0
        %789 = vmatpush1.bf16.msra.mxu0 %v786
        %790 = vmatprep.subr.bf16.mxu0 0
        %791 = vmatpush1.bf16.msra.mxu0 0
        %792 = vmatprep.subr.bf16.mxu0 0
        %793 = vmatpush1.bf16.msra.mxu0 0
        %794 = vmatprep.subr.bf16.mxu0 0
        %795 = vmatpush1.bf16.msra.mxu0 0
        %796 = vmatprep.subr.bf16.mxu0 0
        %797 = vmatpush1.bf16.msra.mxu0 0
        %798 = vmatprep.subr.bf16.mxu0 0
        %799 = vmatpush1.bf16.msra.mxu0 0
        %800 = vmatprep.subr.bf16.mxu0 0
        %801 = vmatpush1.bf16.msra.mxu0 0
        %802 = vmatprep.subr.bf16.mxu0 0
        %803 = vmatpush1.bf16.msra.mxu0 0
        %804 = vmatprep.subr.bf16.mxu0 0
        %805 = vmatpush1.bf16.msra.mxu0 0
        %806 = vmatprep.subr.bf16.mxu0 0
        %807 = vmatpush1.bf16.msra.mxu0 0
        %808 = vmatprep.subr.bf16.mxu0 0
        %809 = vmatpush1.bf16.msra.mxu0 0
        %810 = vmatprep.subr.bf16.mxu0 0
        %811 = vmatpush1.bf16.msra.mxu0 0
        %812 = vmatprep.subr.bf16.mxu0 0
        %813 = vmatpush1.bf16.msra.mxu0 0
        %814 = vmatprep.subr.bf16.mxu0 0
        %815 = vmatpush1.bf16.msra.mxu0 0
        %816 = vmatprep.subr.bf16.mxu0 0
        %817 = vmatpush1.bf16.msra.mxu0 0
        %818 = vmatprep.subr.bf16.mxu0 0
        %819 = vmatpush1.bf16.msra.mxu0 0
        %820 = vmatprep.mubr.bf16.mxu0 0
        %821 = vmatmul.mubr.bf16.gmra.mrb[0].mxu0 %v783
        %v822 = vpop.f32.mrb[0].mxu0
        %v823 = vadd.f32 %v775, %v822
        %v824 = vpop.f32.mrb[0].mxu0
        %v825 = vpop.f32.mrb[0].mxu0
        %v826 = vpop.f32.mrb[0].mxu0
        %827 = vdwg.mxu0
        %v828 = vpack.c.bf16 %v823, %v823
        %vm829 = vcmask 60416
        %830 = vst.msk [vmem:[#allocation2] sm:$0xf] %vm829, %v828
        %831 = vrot.lane.b32.xlu0 %v598, 120
        %v832 = vpop.permute.xlu0 %831
        %833 = vrot.lane.b32.xlu0 %v598, 88
        %v834 = vpop.permute.xlu0 %833
        %v836 = vsel %vm603, %v832, 0
        %v839 = vsel %vm603, %v834, 0
        %841 = vmatprep.subr.bf16.mxu0 0
        %842 = vmatpush1.bf16.xpose.msra.mxu0 %v839
        %843 = vmatprep.subr.bf16.mxu0 0
        %844 = vmatpush1.bf16.xpose.msra.mxu0 0
        %845 = vmatprep.subr.bf16.mxu0 0
        %846 = vmatpush1.bf16.xpose.msra.mxu0 0
        %847 = vmatprep.subr.bf16.mxu0 0
        %848 = vmatpush1.bf16.xpose.msra.mxu0 0
        %849 = vmatprep.subr.bf16.mxu0 0
        %850 = vmatpush1.bf16.xpose.msra.mxu0 0
        %851 = vmatprep.subr.bf16.mxu0 0
        %852 = vmatpush1.bf16.xpose.msra.mxu0 0
        %853 = vmatprep.subr.bf16.mxu0 0
        %854 = vmatpush1.bf16.xpose.msra.mxu0 0
        %855 = vmatprep.subr.bf16.mxu0 0
        %856 = vmatpush1.bf16.xpose.msra.mxu0 0
        %857 = vmatprep.subr.bf16.mxu0 0
        %858 = vmatpush1.bf16.xpose.msra.mxu0 0
        %859 = vmatprep.subr.bf16.mxu0 0
        %860 = vmatpush1.bf16.xpose.msra.mxu0 0
        %861 = vmatprep.subr.bf16.mxu0 0
        %862 = vmatpush1.bf16.xpose.msra.mxu0 0
        %863 = vmatprep.subr.bf16.mxu0 0
        %864 = vmatpush1.bf16.xpose.msra.mxu0 0
        %865 = vmatprep.subr.bf16.mxu0 0
        %866 = vmatpush1.bf16.xpose.msra.mxu0 0
        %867 = vmatprep.subr.bf16.mxu0 0
        %868 = vmatpush1.bf16.xpose.msra.mxu0 0
        %869 = vmatprep.subr.bf16.mxu0 0
        %870 = vmatpush1.bf16.xpose.msra.mxu0 0
        %871 = vmatprep.subr.bf16.mxu0 0
        %872 = vmatpush1.bf16.xpose.msra.mxu0 0
        %873 = vmatprep.mubr.bf16.mxu0 0
        %874 = vmatmul.mubr.bf16.gmra.mrb[0].mxu0 %v836
        %v875 = vpop.f32.mrb[0].mxu0
        %v876 = vadd.f32 0.0, %v875
        %v877 = vpop.f32.mrb[0].mxu0
        %v878 = vpop.f32.mrb[0].mxu0
        %v879 = vpop.f32.mrb[0].mxu0
        %880 = vdwg.mxu0
        %v881 = vsel %vm603, %v876, -inf
        %882 = vmax.xlane.f32.xlu0 %v881
        %v883 = vpop.xlane.xlu0 %882
        %s884 = scalar_lea.vmem %s1, 4
        %v885 = vld [vmem:[%s884] sm:$0xf]
        %v887 = vsel %vm654, %v885, 0
        %889 = vmatprep.subr.bf16.mxu0 0
        %890 = vmatpush1.bf16.msra.mxu0 %v887
        %891 = vmatprep.subr.bf16.mxu0 0
        %892 = vmatpush1.bf16.msra.mxu0 0
        %893 = vmatprep.subr.bf16.mxu0 0
        %894 = vmatpush1.bf16.msra.mxu0 0
        %895 = vmatprep.subr.bf16.mxu0 0
        %896 = vmatpush1.bf16.msra.mxu0 0
        %897 = vmatprep.subr.bf16.mxu0 0
        %898 = vmatpush1.bf16.msra.mxu0 0
        %899 = vmatprep.subr.bf16.mxu0 0
        %900 = vmatpush1.bf16.msra.mxu0 0
        %901 = vmatprep.subr.bf16.mxu0 0
        %902 = vmatpush1.bf16.msra.mxu0 0
        %903 = vmatprep.subr.bf16.mxu0 0
        %904 = vmatpush1.bf16.msra.mxu0 0
        %905 = vmatprep.subr.bf16.mxu0 0
        %906 = vmatpush1.bf16.msra.mxu0 0
        %907 = vmatprep.subr.bf16.mxu0 0
        %908 = vmatpush1.bf16.msra.mxu0 0
        %909 = vmatprep.subr.bf16.mxu0 0
        %910 = vmatpush1.bf16.msra.mxu0 0
        %911 = vmatprep.subr.bf16.mxu0 0
        %912 = vmatpush1.bf16.msra.mxu0 0
        %913 = vmatprep.subr.bf16.mxu0 0
        %914 = vmatpush1.bf16.msra.mxu0 0
        %915 = vmatprep.subr.bf16.mxu0 0
        %916 = vmatpush1.bf16.msra.mxu0 0
        %917 = vmatprep.subr.bf16.mxu0 0
        %918 = vmatpush1.bf16.msra.mxu0 0
        %919 = vmatprep.subr.bf16.mxu0 0
        %920 = vmatpush1.bf16.msra.mxu0 0
        %921 = vmatprep.mubr.bf16.mxu0 0
        %922 = vmatmul.mubr.bf16.gmra.mrb[0].mxu0 %v836
        %v923 = vpop.f32.mrb[0].mxu0
        %v924 = vadd.f32 0.0, %v923
        %v925 = vpop.f32.mrb[0].mxu0
        %v926 = vpop.f32.mrb[0].mxu0
        %v927 = vpop.f32.mrb[0].mxu0
        %928 = vdwg.mxu0
        %v929 = vsel %vm603, %v924, -inf
        %930 = vmax.xlane.f32.xlu0 %v929
        %v931 = vpop.xlane.xlu0 %930
        %v932 = vmax.f32 %v883, %v931
        %v933 = vsub.f32 %v876, %v932
        %v934 = vmul.f32 %v933, 1.442695
        %v935 = vpow.pop %v934
        %v936 = vsel %vm603, %v935, 0.0
        %937 = vadd.xlane.f32.xlu0 %v936
        %v938 = vpop.xlane.xlu0 %937
        %v939 = vmul.f32 %v933, %v935
        %v940 = vsel %vm603, %v939, 0.0
        %941 = vadd.xlane.f32.xlu0 %v940
        %v942 = vpop.xlane.xlu0 %941
        %v943 = vsub.f32 %v924, %v932
        %v944 = vmul.f32 %v943, 1.442695
        %v945 = vpow.pop %v944
        %v946 = vsel %vm603, %v945, 0.0
        %947 = vadd.xlane.f32.xlu0 %v946
        %v948 = vpop.xlane.xlu0 %947
        %v949 = vadd.f32 %v938, %v948
        %v950 = vmul.f32 %v943, %v945
        %v951 = vsel %vm603, %v950, 0.0
        %952 = vadd.xlane.f32.xlu0 %v951
        %v953 = vpop.xlane.xlu0 %952
        %v954 = vadd.f32 %v942, %v953
        %v955 = vlog2.pop %v949
        %v956 = vmul.f32 %v955, 0.6931472
        %v957 = vrcp.pop %v949
        %v958 = vmul.f32 %v954, %v957
        %v959 = vsub.f32 %v956, %v958
        %v960 = vmax.f32 %v728, %v959
        %v961 = vrcp.pop %v949
        %v962 = vmul.f32 %v935, %v961
        %v963 = vpack.c.bf16 %v962, %v962
        %v964 = vmul.f32 %v945, %v961
        %v965 = vpack.c.bf16 %v964, %v964
        %v967 = vunpack.c.l.b16 %v599
        %v968 = vpack.c.b16 %v967, %v967
        %969 = vrot.lane.b32.xlu0 %v968, 120
        %v970 = vpop.permute.xlu0 %969
        %v972 = vsel %vm603, %v965, 0
        %v975 = vsel %vm654, %v970, 0
        %977 = vmatprep.subr.bf16.mxu0 0
        %978 = vmatpush1.bf16.msra.mxu0 %v975
        %979 = vmatprep.subr.bf16.mxu0 0
        %980 = vmatpush1.bf16.msra.mxu0 0
        %981 = vmatprep.subr.bf16.mxu0 0
        %982 = vmatpush1.bf16.msra.mxu0 0
        %983 = vmatprep.subr.bf16.mxu0 0
        %984 = vmatpush1.bf16.msra.mxu0 0
        %985 = vmatprep.subr.bf16.mxu0 0
        %986 = vmatpush1.bf16.msra.mxu0 0
        %987 = vmatprep.subr.bf16.mxu0 0
        %988 = vmatpush1.bf16.msra.mxu0 0
        %989 = vmatprep.subr.bf16.mxu0 0
        %990 = vmatpush1.bf16.msra.mxu0 0
        %991 = vmatprep.subr.bf16.mxu0 0
        %992 = vmatpush1.bf16.msra.mxu0 0
        %993 = vmatprep.subr.bf16.mxu0 0
        %994 = vmatpush1.bf16.msra.mxu0 0
        %995 = vmatprep.subr.bf16.mxu0 0
        %996 = vmatpush1.bf16.msra.mxu0 0
        %997 = vmatprep.subr.bf16.mxu0 0
        %998 = vmatpush1.bf16.msra.mxu0 0
        %999 = vmatprep.subr.bf16.mxu0 0
        %1000 = vmatpush1.bf16.msra.mxu0 0
        %1001 = vmatprep.subr.bf16.mxu0 0
        %1002 = vmatpush1.bf16.msra.mxu0 0
        %1003 = vmatprep.subr.bf16.mxu0 0
        %1004 = vmatpush1.bf16.msra.mxu0 0
        %1005 = vmatprep.subr.bf16.mxu0 0
        %1006 = vmatpush1.bf16.msra.mxu0 0
        %1007 = vmatprep.subr.bf16.mxu0 0
        %1008 = vmatpush1.bf16.msra.mxu0 0
        %1009 = vmatprep.mubr.bf16.mxu0 0
        %1010 = vmatmul.mubr.bf16.gmra.mrb[0].mxu0 %v972
        %v1011 = vpop.f32.mrb[0].mxu0
        %v1012 = vadd.f32 0.0, %v1011
        %v1013 = vpop.f32.mrb[0].mxu0
        %v1014 = vpop.f32.mrb[0].mxu0
        %v1015 = vpop.f32.mrb[0].mxu0
        %1016 = vdwg.mxu0
        %1017 = vrot.lane.b32.xlu0 %v598, 56
        %v1018 = vpop.permute.xlu0 %1017
        %v1020 = vsel %vm603, %v963, 0
        %v1023 = vsel %vm654, %v1018, 0
        %1025 = vmatprep.subr.bf16.mxu0 0
        %1026 = vmatpush1.bf16.msra.mxu0 %v1023
        %1027 = vmatprep.subr.bf16.mxu0 0
        %1028 = vmatpush1.bf16.msra.mxu0 0
        %1029 = vmatprep.subr.bf16.mxu0 0
        %1030 = vmatpush1.bf16.msra.mxu0 0
        %1031 = vmatprep.subr.bf16.mxu0 0
        %1032 = vmatpush1.bf16.msra.mxu0 0
        %1033 = vmatprep.subr.bf16.mxu0 0
        %1034 = vmatpush1.bf16.msra.mxu0 0
        %1035 = vmatprep.subr.bf16.mxu0 0
        %1036 = vmatpush1.bf16.msra.mxu0 0
        %1037 = vmatprep.subr.bf16.mxu0 0
        %1038 = vmatpush1.bf16.msra.mxu0 0
        %1039 = vmatprep.subr.bf16.mxu0 0
        %1040 = vmatpush1.bf16.msra.mxu0 0
        %1041 = vmatprep.subr.bf16.mxu0 0
        %1042 = vmatpush1.bf16.msra.mxu0 0
        %1043 = vmatprep.subr.bf16.mxu0 0
        %1044 = vmatpush1.bf16.msra.mxu0 0
        %1045 = vmatprep.subr.bf16.mxu0 0
        %1046 = vmatpush1.bf16.msra.mxu0 0
        %1047 = vmatprep.subr.bf16.mxu0 0
        %1048 = vmatpush1.bf16.msra.mxu0 0
        %1049 = vmatprep.subr.bf16.mxu0 0
        %1050 = vmatpush1.bf16.msra.mxu0 0
        %1051 = vmatprep.subr.bf16.mxu0 0
        %1052 = vmatpush1.bf16.msra.mxu0 0
        %1053 = vmatprep.subr.bf16.mxu0 0
        %1054 = vmatpush1.bf16.msra.mxu0 0
        %1055 = vmatprep.subr.bf16.mxu0 0
        %1056 = vmatpush1.bf16.msra.mxu0 0
        %1057 = vmatprep.mubr.bf16.mxu0 0
        %1058 = vmatmul.mubr.bf16.gmra.mrb[0].mxu0 %v1020
        %v1059 = vpop.f32.mrb[0].mxu0
        %v1060 = vadd.f32 %v1012, %v1059
        %v1061 = vpop.f32.mrb[0].mxu0
        %v1062 = vpop.f32.mrb[0].mxu0
        %v1063 = vpop.f32.mrb[0].mxu0
        %1064 = vdwg.mxu0
        %v1065 = vpack.c.bf16 %v1060, %v1060
        %v1067 = vunpack.c.l.b16 %v1065
        %v1068 = vpack.c.b16 %v1067, %v1067
        %1069 = vrot.lane.b32.xlu0 %v1068, 8
        %v1070 = vpop.permute.xlu0 %1069
        %vm1072 = vcmask 126016
        %1073 = vst.msk [vmem:[#allocation2] sm:$0xf] %vm1072, %v1070
        %1074 = vrot.lane.b32.xlu0 %v598, 112
        %v1075 = vpop.permute.xlu0 %1074
        %1076 = vrot.lane.b32.xlu0 %v598, 80
        %v1077 = vpop.permute.xlu0 %1076
        %v1079 = vsel %vm603, %v1075, 0
        %v1082 = vsel %vm603, %v1077, 0
        %1084 = vmatprep.subr.bf16.mxu0 0
        %1085 = vmatpush1.bf16.xpose.msra.mxu0 %v1082
        %1086 = vmatprep.subr.bf16.mxu0 0
        %1087 = vmatpush1.bf16.xpose.msra.mxu0 0
        %1088 = vmatprep.subr.bf16.mxu0 0
        %1089 = vmatpush1.bf16.xpose.msra.mxu0 0
        %1090 = vmatprep.subr.bf16.mxu0 0
        %1091 = vmatpush1.bf16.xpose.msra.mxu0 0
        %1092 = vmatprep.subr.bf16.mxu0 0
        %1093 = vmatpush1.bf16.xpose.msra.mxu0 0
        %1094 = vmatprep.subr.bf16.mxu0 0
        %1095 = vmatpush1.bf16.xpose.msra.mxu0 0
        %1096 = vmatprep.subr.bf16.mxu0 0
        %1097 = vmatpush1.bf16.xpose.msra.mxu0 0
        %1098 = vmatprep.subr.bf16.mxu0 0
        %1099 = vmatpush1.bf16.xpose.msra.mxu0 0
        %1100 = vmatprep.subr.bf16.mxu0 0
        %1101 = vmatpush1.bf16.xpose.msra.mxu0 0
        %1102 = vmatprep.subr.bf16.mxu0 0
        %1103 = vmatpush1.bf16.xpose.msra.mxu0 0
        %1104 = vmatprep.subr.bf16.mxu0 0
        %1105 = vmatpush1.bf16.xpose.msra.mxu0 0
        %1106 = vmatprep.subr.bf16.mxu0 0
        %1107 = vmatpush1.bf16.xpose.msra.mxu0 0
        %1108 = vmatprep.subr.bf16.mxu0 0
        %1109 = vmatpush1.bf16.xpose.msra.mxu0 0
        %1110 = vmatprep.subr.bf16.mxu0 0
        %1111 = vmatpush1.bf16.xpose.msra.mxu0 0
        %1112 = vmatprep.subr.bf16.mxu0 0
        %1113 = vmatpush1.bf16.xpose.msra.mxu0 0
        %1114 = vmatprep.subr.bf16.mxu0 0
        %1115 = vmatpush1.bf16.xpose.msra.mxu0 0
        %1116 = vmatprep.mubr.bf16.mxu0 0
        %1117 = vmatmul.mubr.bf16.gmra.mrb[0].mxu0 %v1079
        %v1118 = vpop.f32.mrb[0].mxu0
        %v1119 = vadd.f32 0.0, %v1118
        %v1120 = vpop.f32.mrb[0].mxu0
        %v1121 = vpop.f32.mrb[0].mxu0
        %v1122 = vpop.f32.mrb[0].mxu0
        %1123 = vdwg.mxu0
        %v1124 = vsel %vm603, %v1119, -inf
        %1125 = vmax.xlane.f32.xlu0 %v1124
        %v1126 = vpop.xlane.xlu0 %1125
        %s1127 = scalar_lea.vmem %s1, 8
        %v1128 = vld [vmem:[%s1127] sm:$0xf]
        %v1130 = vsel %vm654, %v1128, 0
        %1132 = vmatprep.subr.bf16.mxu0 0
        %1133 = vmatpush1.bf16.msra.mxu0 %v1130
        %1134 = vmatprep.subr.bf16.mxu0 0
        %1135 = vmatpush1.bf16.msra.mxu0 0
        %1136 = vmatprep.subr.bf16.mxu0 0
        %1137 = vmatpush1.bf16.msra.mxu0 0
        %1138 = vmatprep.subr.bf16.mxu0 0
        %1139 = vmatpush1.bf16.msra.mxu0 0
        %1140 = vmatprep.subr.bf16.mxu0 0
        %1141 = vmatpush1.bf16.msra.mxu0 0
        %1142 = vmatprep.subr.bf16.mxu0 0
        %1143 = vmatpush1.bf16.msra.mxu0 0
        %1144 = vmatprep.subr.bf16.mxu0 0
        %1145 = vmatpush1.bf16.msra.mxu0 0
        %1146 = vmatprep.subr.bf16.mxu0 0
        %1147 = vmatpush1.bf16.msra.mxu0 0
        %1148 = vmatprep.subr.bf16.mxu0 0
        %1149 = vmatpush1.bf16.msra.mxu0 0
        %1150 = vmatprep.subr.bf16.mxu0 0
        %1151 = vmatpush1.bf16.msra.mxu0 0
        %1152 = vmatprep.subr.bf16.mxu0 0
        %1153 = vmatpush1.bf16.msra.mxu0 0
        %1154 = vmatprep.subr.bf16.mxu0 0
        %1155 = vmatpush1.bf16.msra.mxu0 0
        %1156 = vmatprep.subr.bf16.mxu0 0
        %1157 = vmatpush1.bf16.msra.mxu0 0
        %1158 = vmatprep.subr.bf16.mxu0 0
        %1159 = vmatpush1.bf16.msra.mxu0 0
        %1160 = vmatprep.subr.bf16.mxu0 0
        %1161 = vmatpush1.bf16.msra.mxu0 0
        %1162 = vmatprep.subr.bf16.mxu0 0
        %1163 = vmatpush1.bf16.msra.mxu0 0
        %1164 = vmatprep.mubr.bf16.mxu0 0
        %1165 = vmatmul.mubr.bf16.gmra.mrb[0].mxu0 %v1079
        %v1166 = vpop.f32.mrb[0].mxu0
        %v1167 = vadd.f32 0.0, %v1166
        %v1168 = vpop.f32.mrb[0].mxu0
        %v1169 = vpop.f32.mrb[0].mxu0
        %v1170 = vpop.f32.mrb[0].mxu0
        %1171 = vdwg.mxu0
        %v1172 = vsel %vm603, %v1167, -inf
        %1173 = vmax.xlane.f32.xlu0 %v1172
        %v1174 = vpop.xlane.xlu0 %1173
        %v1175 = vmax.f32 %v1126, %v1174
        %v1176 = vsub.f32 %v1119, %v1175
        %v1177 = vmul.f32 %v1176, 1.442695
        %v1178 = vpow.pop %v1177
        %v1179 = vsel %vm603, %v1178, 0.0
        %1180 = vadd.xlane.f32.xlu0 %v1179
        %v1181 = vpop.xlane.xlu0 %1180
        %v1182 = vmul.f32 %v1176, %v1178
        %v1183 = vsel %vm603, %v1182, 0.0
        %1184 = vadd.xlane.f32.xlu0 %v1183
        %v1185 = vpop.xlane.xlu0 %1184
        %v1186 = vsub.f32 %v1167, %v1175
        %v1187 = vmul.f32 %v1186, 1.442695
        %v1188 = vpow.pop %v1187
        %v1189 = vsel %vm603, %v1188, 0.0
        %1190 = vadd.xlane.f32.xlu0 %v1189
        %v1191 = vpop.xlane.xlu0 %1190
        %v1192 = vadd.f32 %v1181, %v1191
        %v1193 = vmul.f32 %v1186, %v1188
        %v1194 = vsel %vm603, %v1193, 0.0
        %1195 = vadd.xlane.f32.xlu0 %v1194
        %v1196 = vpop.xlane.xlu0 %1195
        %v1197 = vadd.f32 %v1185, %v1196
        %v1198 = vlog2.pop %v1192
        %v1199 = vmul.f32 %v1198, 0.6931472
        %v1200 = vrcp.pop %v1192
        %v1201 = vmul.f32 %v1197, %v1200
        %v1202 = vsub.f32 %v1199, %v1201
        %v1203 = vmax.f32 %v960, %v1202
        %v1204 = vrcp.pop %v1192
        %v1205 = vmul.f32 %v1178, %v1204
        %v1206 = vpack.c.bf16 %v1205, %v1205
        %v1207 = vmul.f32 %v1188, %v1204
        %v1208 = vpack.c.bf16 %v1207, %v1207
        %1209 = vrot.lane.b32.xlu0 %v968, 112
        %v1210 = vpop.permute.xlu0 %1209
        %v1212 = vsel %vm603, %v1208, 0
        %v1215 = vsel %vm654, %v1210, 0
        %1217 = vmatprep.subr.bf16.mxu0 0
        %1218 = vmatpush1.bf16.msra.mxu0 %v1215
        %1219 = vmatprep.subr.bf16.mxu0 0
        %1220 = vmatpush1.bf16.msra.mxu0 0
        %1221 = vmatprep.subr.bf16.mxu0 0
        %1222 = vmatpush1.bf16.msra.mxu0 0
        %1223 = vmatprep.subr.bf16.mxu0 0
        %1224 = vmatpush1.bf16.msra.mxu0 0
        %1225 = vmatprep.subr.bf16.mxu0 0
        %1226 = vmatpush1.bf16.msra.mxu0 0
        %1227 = vmatprep.subr.bf16.mxu0 0
        %1228 = vmatpush1.bf16.msra.mxu0 0
        %1229 = vmatprep.subr.bf16.mxu0 0
        %1230 = vmatpush1.bf16.msra.mxu0 0
        %1231 = vmatprep.subr.bf16.mxu0 0
        %1232 = vmatpush1.bf16.msra.mxu0 0
        %1233 = vmatprep.subr.bf16.mxu0 0
        %1234 = vmatpush1.bf16.msra.mxu0 0
        %1235 = vmatprep.subr.bf16.mxu0 0
        %1236 = vmatpush1.bf16.msra.mxu0 0
        %1237 = vmatprep.subr.bf16.mxu0 0
        %1238 = vmatpush1.bf16.msra.mxu0 0
        %1239 = vmatprep.subr.bf16.mxu0 0
        %1240 = vmatpush1.bf16.msra.mxu0 0
        %1241 = vmatprep.subr.bf16.mxu0 0
        %1242 = vmatpush1.bf16.msra.mxu0 0
        %1243 = vmatprep.subr.bf16.mxu0 0
        %1244 = vmatpush1.bf16.msra.mxu0 0
        %1245 = vmatprep.subr.bf16.mxu0 0
        %1246 = vmatpush1.bf16.msra.mxu0 0
        %1247 = vmatprep.subr.bf16.mxu0 0
        %1248 = vmatpush1.bf16.msra.mxu0 0
        %1249 = vmatprep.mubr.bf16.mxu0 0
        %1250 = vmatmul.mubr.bf16.gmra.mrb[0].mxu0 %v1212
        %v1251 = vpop.f32.mrb[0].mxu0
        %v1252 = vadd.f32 0.0, %v1251
        %v1253 = vpop.f32.mrb[0].mxu0
        %v1254 = vpop.f32.mrb[0].mxu0
        %v1255 = vpop.f32.mrb[0].mxu0
        %1256 = vdwg.mxu0
        %1257 = vrot.lane.b32.xlu0 %v598, 48
        %v1258 = vpop.permute.xlu0 %1257
        %v1260 = vsel %vm603, %v1206, 0
        %v1263 = vsel %vm654, %v1258, 0
        %1265 = vmatprep.subr.bf16.mxu0 0
        %1266 = vmatpush1.bf16.msra.mxu0 %v1263
        %1267 = vmatprep.subr.bf16.mxu0 0
        %1268 = vmatpush1.bf16.msra.mxu0 0
        %1269 = vmatprep.subr.bf16.mxu0 0
        %1270 = vmatpush1.bf16.msra.mxu0 0
        %1271 = vmatprep.subr.bf16.mxu0 0
        %1272 = vmatpush1.bf16.msra.mxu0 0
        %1273 = vmatprep.subr.bf16.mxu0 0
        %1274 = vmatpush1.bf16.msra.mxu0 0
        %1275 = vmatprep.subr.bf16.mxu0 0
        %1276 = vmatpush1.bf16.msra.mxu0 0
        %1277 = vmatprep.subr.bf16.mxu0 0
        %1278 = vmatpush1.bf16.msra.mxu0 0
        %1279 = vmatprep.subr.bf16.mxu0 0
        %1280 = vmatpush1.bf16.msra.mxu0 0
        %1281 = vmatprep.subr.bf16.mxu0 0
        %1282 = vmatpush1.bf16.msra.mxu0 0
        %1283 = vmatprep.subr.bf16.mxu0 0
        %1284 = vmatpush1.bf16.msra.mxu0 0
        %1285 = vmatprep.subr.bf16.mxu0 0
        %1286 = vmatpush1.bf16.msra.mxu0 0
        %1287 = vmatprep.subr.bf16.mxu0 0
        %1288 = vmatpush1.bf16.msra.mxu0 0
        %1289 = vmatprep.subr.bf16.mxu0 0
        %1290 = vmatpush1.bf16.msra.mxu0 0
        %1291 = vmatprep.subr.bf16.mxu0 0
        %1292 = vmatpush1.bf16.msra.mxu0 0
        %1293 = vmatprep.subr.bf16.mxu0 0
        %1294 = vmatpush1.bf16.msra.mxu0 0
        %1295 = vmatprep.subr.bf16.mxu0 0
        %1296 = vmatpush1.bf16.msra.mxu0 0
        %1297 = vmatprep.mubr.bf16.mxu0 0
        %1298 = vmatmul.mubr.bf16.gmra.mrb[0].mxu0 %v1260
        %v1299 = vpop.f32.mrb[0].mxu0
        %v1300 = vadd.f32 %v1252, %v1299
        %v1301 = vpop.f32.mrb[0].mxu0
        %v1302 = vpop.f32.mrb[0].mxu0
        %v1303 = vpop.f32.mrb[0].mxu0
        %1304 = vdwg.mxu0
        %v1305 = vpack.c.bf16 %v1300, %v1300
        %v1307 = vunpack.c.l.b16 %v1305
        %v1308 = vpack.c.b16 %v1307, %v1307
        %1309 = vrot.lane.b32.xlu0 %v1308, 16
        %v1310 = vpop.permute.xlu0 %1309
        %vm1312 = vcmask 191616
        %1313 = vst.msk [vmem:[#allocation2] sm:$0xf] %vm1312, %v1310
        %1314 = vrot.lane.b32.xlu0 %v598, 104
        %v1315 = vpop.permute.xlu0 %1314
        %1316 = vrot.lane.b32.xlu0 %v598, 72
        %v1317 = vpop.permute.xlu0 %1316
        %v1319 = vsel %vm603, %v1315, 0
        %v1322 = vsel %vm603, %v1317, 0
        %1324 = vmatprep.subr.bf16.mxu0 0
        %1325 = vmatpush1.bf16.xpose.msra.mxu0 %v1322
        %1326 = vmatprep.subr.bf16.mxu0 0
        %1327 = vmatpush1.bf16.xpose.msra.mxu0 0
        %1328 = vmatprep.subr.bf16.mxu0 0
        %1329 = vmatpush1.bf16.xpose.msra.mxu0 0
        %1330 = vmatprep.subr.bf16.mxu0 0
        %1331 = vmatpush1.bf16.xpose.msra.mxu0 0
        %1332 = vmatprep.subr.bf16.mxu0 0
        %1333 = vmatpush1.bf16.xpose.msra.mxu0 0
        %1334 = vmatprep.subr.bf16.mxu0 0
        %1335 = vmatpush1.bf16.xpose.msra.mxu0 0
        %1336 = vmatprep.subr.bf16.mxu0 0
        %1337 = vmatpush1.bf16.xpose.msra.mxu0 0
        %1338 = vmatprep.subr.bf16.mxu0 0
        %1339 = vmatpush1.bf16.xpose.msra.mxu0 0
        %1340 = vmatprep.subr.bf16.mxu0 0
        %1341 = vmatpush1.bf16.xpose.msra.mxu0 0
        %1342 = vmatprep.subr.bf16.mxu0 0
        %1343 = vmatpush1.bf16.xpose.msra.mxu0 0
        %1344 = vmatprep.subr.bf16.mxu0 0
        %1345 = vmatpush1.bf16.xpose.msra.mxu0 0
        %1346 = vmatprep.subr.bf16.mxu0 0
        %1347 = vmatpush1.bf16.xpose.msra.mxu0 0
        %1348 = vmatprep.subr.bf16.mxu0 0
        %1349 = vmatpush1.bf16.xpose.msra.mxu0 0
        %1350 = vmatprep.subr.bf16.mxu0 0
        %1351 = vmatpush1.bf16.xpose.msra.mxu0 0
        %1352 = vmatprep.subr.bf16.mxu0 0
        %1353 = vmatpush1.bf16.xpose.msra.mxu0 0
        %1354 = vmatprep.subr.bf16.mxu0 0
        %1355 = vmatpush1.bf16.xpose.msra.mxu0 0
        %1356 = vmatprep.mubr.bf16.mxu0 0
        %1357 = vmatmul.mubr.bf16.gmra.mrb[0].mxu0 %v1319
        %v1358 = vpop.f32.mrb[0].mxu0
        %v1359 = vadd.f32 0.0, %v1358
        %v1360 = vpop.f32.mrb[0].mxu0
        %v1361 = vpop.f32.mrb[0].mxu0
        %v1362 = vpop.f32.mrb[0].mxu0
        %1363 = vdwg.mxu0
        %v1364 = vsel %vm603, %v1359, -inf
        %1365 = vmax.xlane.f32.xlu0 %v1364
        %v1366 = vpop.xlane.xlu0 %1365
        %s1367 = scalar_lea.vmem %s1, 12
        %v1368 = vld [vmem:[%s1367] sm:$0xf]
        %v1370 = vsel %vm654, %v1368, 0
        %1372 = vmatprep.subr.bf16.mxu0 0
        %1373 = vmatpush1.bf16.msra.mxu0 %v1370
        %1374 = vmatprep.subr.bf16.mxu0 0
        %1375 = vmatpush1.bf16.msra.mxu0 0
        %1376 = vmatprep.subr.bf16.mxu0 0
        %1377 = vmatpush1.bf16.msra.mxu0 0
        %1378 = vmatprep.subr.bf16.mxu0 0
        %1379 = vmatpush1.bf16.msra.mxu0 0
        %1380 = vmatprep.subr.bf16.mxu0 0
        %1381 = vmatpush1.bf16.msra.mxu0 0
        %1382 = vmatprep.subr.bf16.mxu0 0
        %1383 = vmatpush1.bf16.msra.mxu0 0
        %1384 = vmatprep.subr.bf16.mxu0 0
        %1385 = vmatpush1.bf16.msra.mxu0 0
        %1386 = vmatprep.subr.bf16.mxu0 0
        %1387 = vmatpush1.bf16.msra.mxu0 0
        %1388 = vmatprep.subr.bf16.mxu0 0
        %1389 = vmatpush1.bf16.msra.mxu0 0
        %1390 = vmatprep.subr.bf16.mxu0 0
        %1391 = vmatpush1.bf16.msra.mxu0 0
        %1392 = vmatprep.subr.bf16.mxu0 0
        %1393 = vmatpush1.bf16.msra.mxu0 0
        %1394 = vmatprep.subr.bf16.mxu0 0
        %1395 = vmatpush1.bf16.msra.mxu0 0
        %1396 = vmatprep.subr.bf16.mxu0 0
        %1397 = vmatpush1.bf16.msra.mxu0 0
        %1398 = vmatprep.subr.bf16.mxu0 0
        %1399 = vmatpush1.bf16.msra.mxu0 0
        %1400 = vmatprep.subr.bf16.mxu0 0
        %1401 = vmatpush1.bf16.msra.mxu0 0
        %1402 = vmatprep.subr.bf16.mxu0 0
        %1403 = vmatpush1.bf16.msra.mxu0 0
        %1404 = vmatprep.mubr.bf16.mxu0 0
        %1405 = vmatmul.mubr.bf16.gmra.mrb[0].mxu0 %v1319
        %v1406 = vpop.f32.mrb[0].mxu0
        %v1407 = vadd.f32 0.0, %v1406
        %v1408 = vpop.f32.mrb[0].mxu0
        %v1409 = vpop.f32.mrb[0].mxu0
        %v1410 = vpop.f32.mrb[0].mxu0
        %1411 = vdwg.mxu0
        %v1412 = vsel %vm603, %v1407, -inf
        %1413 = vmax.xlane.f32.xlu0 %v1412
        %v1414 = vpop.xlane.xlu0 %1413
        %v1415 = vmax.f32 %v1366, %v1414
        %v1416 = vsub.f32 %v1359, %v1415
        %v1417 = vmul.f32 %v1416, 1.442695
        %v1418 = vpow.pop %v1417
        %v1419 = vsel %vm603, %v1418, 0.0
        %1420 = vadd.xlane.f32.xlu0 %v1419
        %v1421 = vpop.xlane.xlu0 %1420
        %v1422 = vmul.f32 %v1416, %v1418
        %v1423 = vsel %vm603, %v1422, 0.0
        %1424 = vadd.xlane.f32.xlu0 %v1423
        %v1425 = vpop.xlane.xlu0 %1424
        %v1426 = vsub.f32 %v1407, %v1415
        %v1427 = vmul.f32 %v1426, 1.442695
        %v1428 = vpow.pop %v1427
        %v1429 = vsel %vm603, %v1428, 0.0
        %1430 = vadd.xlane.f32.xlu0 %v1429
        %v1431 = vpop.xlane.xlu0 %1430
        %v1432 = vadd.f32 %v1421, %v1431
        %v1433 = vmul.f32 %v1426, %v1428
        %v1434 = vsel %vm603, %v1433, 0.0
        %1435 = vadd.xlane.f32.xlu0 %v1434
        %v1436 = vpop.xlane.xlu0 %1435
        %v1437 = vadd.f32 %v1425, %v1436
        %v1438 = vlog2.pop %v1432
        %v1439 = vmul.f32 %v1438, 0.6931472
        %v1440 = vrcp.pop %v1432
        %v1441 = vmul.f32 %v1437, %v1440
        %v1442 = vsub.f32 %v1439, %v1441
        %v1443 = vmax.f32 %v1203, %v1442
        %v1444 = vrcp.pop %v1432
        %v1445 = vmul.f32 %v1418, %v1444
        %v1446 = vpack.c.bf16 %v1445, %v1445
        %v1447 = vmul.f32 %v1428, %v1444
        %v1448 = vpack.c.bf16 %v1447, %v1447
        %1449 = vrot.lane.b32.xlu0 %v968, 104
        %v1450 = vpop.permute.xlu0 %1449
        %v1452 = vsel %vm603, %v1448, 0
        %v1455 = vsel %vm654, %v1450, 0
        %1457 = vmatprep.subr.bf16.mxu0 0
        %1458 = vmatpush1.bf16.msra.mxu0 %v1455
        %1459 = vmatprep.subr.bf16.mxu0 0
        %1460 = vmatpush1.bf16.msra.mxu0 0
        %1461 = vmatprep.subr.bf16.mxu0 0
        %1462 = vmatpush1.bf16.msra.mxu0 0
        %1463 = vmatprep.subr.bf16.mxu0 0
        %1464 = vmatpush1.bf16.msra.mxu0 0
        %1465 = vmatprep.subr.bf16.mxu0 0
        %1466 = vmatpush1.bf16.msra.mxu0 0
        %1467 = vmatprep.subr.bf16.mxu0 0
        %1468 = vmatpush1.bf16.msra.mxu0 0
        %1469 = vmatprep.subr.bf16.mxu0 0
        %1470 = vmatpush1.bf16.msra.mxu0 0
        %1471 = vmatprep.subr.bf16.mxu0 0
        %1472 = vmatpush1.bf16.msra.mxu0 0
        %1473 = vmatprep.subr.bf16.mxu0 0
        %1474 = vmatpush1.bf16.msra.mxu0 0
        %1475 = vmatprep.subr.bf16.mxu0 0
        %1476 = vmatpush1.bf16.msra.mxu0 0
        %1477 = vmatprep.subr.bf16.mxu0 0
        %1478 = vmatpush1.bf16.msra.mxu0 0
        %1479 = vmatprep.subr.bf16.mxu0 0
        %1480 = vmatpush1.bf16.msra.mxu0 0
        %1481 = vmatprep.subr.bf16.mxu0 0
        %1482 = vmatpush1.bf16.msra.mxu0 0
        %1483 = vmatprep.subr.bf16.mxu0 0
        %1484 = vmatpush1.bf16.msra.mxu0 0
        %1485 = vmatprep.subr.bf16.mxu0 0
        %1486 = vmatpush1.bf16.msra.mxu0 0
        %1487 = vmatprep.subr.bf16.mxu0 0
        %1488 = vmatpush1.bf16.msra.mxu0 0
        %1489 = vmatprep.mubr.bf16.mxu0 0
        %1490 = vmatmul.mubr.bf16.gmra.mrb[0].mxu0 %v1452
        %v1491 = vpop.f32.mrb[0].mxu0
        %v1492 = vadd.f32 0.0, %v1491
        %v1493 = vpop.f32.mrb[0].mxu0
        %v1494 = vpop.f32.mrb[0].mxu0
        %v1495 = vpop.f32.mrb[0].mxu0
        %1496 = vdwg.mxu0
        %1497 = vrot.lane.b32.xlu0 %v598, 40
        %v1498 = vpop.permute.xlu0 %1497
        %v1500 = vsel %vm603, %v1446, 0
        %v1503 = vsel %vm654, %v1498, 0
        %1505 = vmatprep.subr.bf16.mxu0 0
        %1506 = vmatpush1.bf16.msra.mxu0 %v1503
        %1507 = vmatprep.subr.bf16.mxu0 0
        %1508 = vmatpush1.bf16.msra.mxu0 0
        %1509 = vmatprep.subr.bf16.mxu0 0
        %1510 = vmatpush1.bf16.msra.mxu0 0
        %1511 = vmatprep.subr.bf16.mxu0 0
        %1512 = vmatpush1.bf16.msra.mxu0 0
        %1513 = vmatprep.subr.bf16.mxu0 0
        %1514 = vmatpush1.bf16.msra.mxu0 0
        %1515 = vmatprep.subr.bf16.mxu0 0
        %1516 = vmatpush1.bf16.msra.mxu0 0
        %1517 = vmatprep.subr.bf16.mxu0 0
        %1518 = vmatpush1.bf16.msra.mxu0 0
        %1519 = vmatprep.subr.bf16.mxu0 0
        %1520 = vmatpush1.bf16.msra.mxu0 0
        %1521 = vmatprep.subr.bf16.mxu0 0
        %1522 = vmatpush1.bf16.msra.mxu0 0
        %1523 = vmatprep.subr.bf16.mxu0 0
        %1524 = vmatpush1.bf16.msra.mxu0 0
        %1525 = vmatprep.subr.bf16.mxu0 0
        %1526 = vmatpush1.bf16.msra.mxu0 0
        %1527 = vmatprep.subr.bf16.mxu0 0
        %1528 = vmatpush1.bf16.msra.mxu0 0
        %1529 = vmatprep.subr.bf16.mxu0 0
        %1530 = vmatpush1.bf16.msra.mxu0 0
        %1531 = vmatprep.subr.bf16.mxu0 0
        %1532 = vmatpush1.bf16.msra.mxu0 0
        %1533 = vmatprep.subr.bf16.mxu0 0
        %1534 = vmatpush1.bf16.msra.mxu0 0
        %1535 = vmatprep.subr.bf16.mxu0 0
        %1536 = vmatpush1.bf16.msra.mxu0 0
        %1537 = vmatprep.mubr.bf16.mxu0 0
        %1538 = vmatmul.mubr.bf16.gmra.mrb[0].mxu0 %v1500
        %v1539 = vpop.f32.mrb[0].mxu0
        %v1540 = vadd.f32 %v1492, %v1539
        %v1541 = vpop.f32.mrb[0].mxu0
        %v1542 = vpop.f32.mrb[0].mxu0
        %v1543 = vpop.f32.mrb[0].mxu0
        %1544 = vdwg.mxu0
        %v1545 = vpack.c.bf16 %v1540, %v1540
        %v1547 = vunpack.c.l.b16 %v1545
        %v1548 = vpack.c.b16 %v1547, %v1547
        %1549 = vrot.lane.b32.xlu0 %v1548, 24
        %v1550 = vpop.permute.xlu0 %1549
        %vm1552 = vcmask 257216
        %1553 = vst.msk [vmem:[#allocation2] sm:$0xf] %vm1552, %v1550
        %vm1554 = vcmask 7168
        %1555 = vst.msk [vmem:[%s527] sm:$0xff] %vm1554, %v1443
        %v1556 = vld [vmem:[#allocation2] sm:$0xf]
        %v1557 = vld [vmem:[%s5] sm:$0xf]
        %v1558 = vld [vmem:[%s5 + $0x4] sm:$0xf]
        %v1559 = vld [vmem:[%s5 + $0x8] sm:$0xf]
        %v1560 = vld [vmem:[%s5 + $0xc] sm:$0xf]
        %v1561 = vld [vmem:[%s6] sm:$0x1]
        %v1563 = vlaneseq
        %v1564 = vshrl.u32 %v1563, 7
        %v1565 = vsub.s32 0, %v1564
        %v1566 = vrot.slane %v1561, %v1565
        %v1572 = vunpack.c.l.b16 %v1557
        %v1573 = vunpack.c.l.b16 %v1558
        %v1574 = vunpack.c.l.b16 %v1559
        %v1575 = vunpack.c.l.b16 %v1560
        %v1576 = vpack.c.b16 %v1573, %v1572
        %v1577 = vpack.c.b16 %v1575, %v1574
        %v1581 = vsel %vm554, %v1556, 0
        %1583 = vmatprep.subr.bf16.mxu0 0
        %1584 = vmatpush1.bf16.msra.mxu0 %v1576
        %1585 = vmatprep.subr.bf16.mxu0 0
        %1586 = vmatpush1.bf16.msra.mxu0 %v1577
        %1587 = vmatprep.subr.bf16.mxu0 0
        %1588 = vmatpush1.bf16.msra.mxu0 0
        %1589 = vmatprep.subr.bf16.mxu0 0
        %1590 = vmatpush1.bf16.msra.mxu0 0
        %1591 = vmatprep.subr.bf16.mxu0 0
        %1592 = vmatpush1.bf16.msra.mxu0 0
        %1593 = vmatprep.subr.bf16.mxu0 0
        %1594 = vmatpush1.bf16.msra.mxu0 0
        %1595 = vmatprep.subr.bf16.mxu0 0
        %1596 = vmatpush1.bf16.msra.mxu0 0
        %1597 = vmatprep.subr.bf16.mxu0 0
        %1598 = vmatpush1.bf16.msra.mxu0 0
        %1599 = vmatprep.subr.bf16.mxu0 0
        %1600 = vmatpush1.bf16.msra.mxu0 0
        %1601 = vmatprep.subr.bf16.mxu0 0
        %1602 = vmatpush1.bf16.msra.mxu0 0
        %1603 = vmatprep.subr.bf16.mxu0 0
        %1604 = vmatpush1.bf16.msra.mxu0 0
        %1605 = vmatprep.subr.bf16.mxu0 0
        %1606 = vmatpush1.bf16.msra.mxu0 0
        %1607 = vmatprep.subr.bf16.mxu0 0
        %1608 = vmatpush1.bf16.msra.mxu0 0
        %1609 = vmatprep.subr.bf16.mxu0 0
        %1610 = vmatpush1.bf16.msra.mxu0 0
        %1611 = vmatprep.subr.bf16.mxu0 0
        %1612 = vmatpush1.bf16.msra.mxu0 0
        %1613 = vmatprep.subr.bf16.mxu0 0
        %1614 = vmatpush1.bf16.msra.mxu0 0
        %1615 = vmatprep.mubr.bf16.mxu0 0
        %1616 = vmatmul.mubr.bf16.gmra.mrb[0].mxu0 %v1581
        %v1617 = vpop.f32.mrb[0].mxu0
        %v1618 = vadd.f32 %v1566, %v1617
        %v1619 = vpop.f32.mrb[0].mxu0
        %v1620 = vpop.f32.mrb[0].mxu0
        %v1621 = vpop.f32.mrb[0].mxu0
        %1622 = vdwg.mxu0
        %v1623 = vadd.f32 %v529, %v1618
        %v1624 = vsel %vm554, %v1623, 0.0
        %1625 = vadd.xlane.f32.xlu0 %v1624
        %v1626 = vpop.xlane.xlu0 %1625
        %v1627 = vrcp.pop 32.0
        %v1628 = vmul.f32 %v1626, %v1627
        %v1629 = vsub.f32 %v1623, %v1628
        %v1630 = vmul.f32 %v1629, %v1629
        %v1631 = vsel %vm554, %v1630, 0.0
        %1632 = vadd.xlane.f32.xlu0 %v1631
        %v1633 = vpop.xlane.xlu0 %1632
        %v1634 = vmul.f32 %v1633, %v1627
        %v1635 = vadd.f32 %v1634, 1e-05
        %v1636 = vrsqrt.pop %v1635
        %v1637 = vmul.f32 %v1629, %v1636
        %v1638 = vld [vmem:[%s7] sm:$0x1]
        %v1640 = vlaneseq
        %v1641 = vshrl.u32 %v1640, 7
        %v1642 = vsub.s32 0, %v1641
        %v1643 = vrot.slane %v1638, %v1642
        %v1645 = vmul.f32 %v1637, %v1643
        %v1646 = vld [vmem:[%s8] sm:$0x1]
        %v1648 = vlaneseq
        %v1649 = vshrl.u32 %v1648, 7
        %v1650 = vsub.s32 0, %v1649
        %v1651 = vrot.slane %v1646, %v1650
        %v1653 = vadd.f32 %v1645, %v1651
        %v1654 = vpack.c.bf16 %v1653, %v1653
        %v1655 = vld [vmem:[%s9] sm:$0xf]
        %v1656 = vld [vmem:[%s9 + $0x4] sm:$0xf]
        %v1657 = vld [vmem:[%s9 + $0x8] sm:$0xf]
        %v1658 = vld [vmem:[%s9 + $0xc] sm:$0xf]
        %v1659 = vld [vmem:[%s10] sm:$0x1]
        %v1661 = vlaneseq
        %v1662 = vshrl.u32 %v1661, 7
        %v1663 = vsub.s32 0, %v1662
        %v1664 = vrot.slane %v1659, %v1663
        %v1670 = vunpack.c.l.b16 %v1655
        %v1671 = vunpack.c.l.b16 %v1656
        %v1672 = vunpack.c.l.b16 %v1657
        %v1673 = vunpack.c.l.b16 %v1658
        %v1674 = vpack.c.b16 %v1671, %v1670
        %v1675 = vpack.c.b16 %v1673, %v1672
        %v1679 = vsel %vm554, %v1654, 0
        %1681 = vmatprep.subr.bf16.mxu0 0
        %1682 = vmatpush1.bf16.msra.mxu0 %v1674
        %1683 = vmatprep.subr.bf16.mxu0 0
        %1684 = vmatpush1.bf16.msra.mxu0 %v1675
        %1685 = vmatprep.subr.bf16.mxu0 0
        %1686 = vmatpush1.bf16.msra.mxu0 0
        %1687 = vmatprep.subr.bf16.mxu0 0
        %1688 = vmatpush1.bf16.msra.mxu0 0
        %1689 = vmatprep.subr.bf16.mxu0 0
        %1690 = vmatpush1.bf16.msra.mxu0 0
        %1691 = vmatprep.subr.bf16.mxu0 0
        %1692 = vmatpush1.bf16.msra.mxu0 0
        %1693 = vmatprep.subr.bf16.mxu0 0
        %1694 = vmatpush1.bf16.msra.mxu0 0
        %1695 = vmatprep.subr.bf16.mxu0 0
        %1696 = vmatpush1.bf16.msra.mxu0 0
        %1697 = vmatprep.subr.bf16.mxu0 0
        %1698 = vmatpush1.bf16.msra.mxu0 0
        %1699 = vmatprep.subr.bf16.mxu0 0
        %1700 = vmatpush1.bf16.msra.mxu0 0
        %1701 = vmatprep.subr.bf16.mxu0 0
        %1702 = vmatpush1.bf16.msra.mxu0 0
        %1703 = vmatprep.subr.bf16.mxu0 0
        %1704 = vmatpush1.bf16.msra.mxu0 0
        %1705 = vmatprep.subr.bf16.mxu0 0
        %1706 = vmatpush1.bf16.msra.mxu0 0
        %1707 = vmatprep.subr.bf16.mxu0 0
        %1708 = vmatpush1.bf16.msra.mxu0 0
        %1709 = vmatprep.subr.bf16.mxu0 0
        %1710 = vmatpush1.bf16.msra.mxu0 0
        %1711 = vmatprep.subr.bf16.mxu0 0
        %1712 = vmatpush1.bf16.msra.mxu0 0
        %1713 = vmatprep.mubr.bf16.mxu0 0
        %1714 = vmatmul.mubr.bf16.gmra.mrb[0].mxu0 %v1679
        %v1715 = vpop.f32.mrb[0].mxu0
        %v1716 = vadd.f32 %v1664, %v1715
        %v1717 = vpop.f32.mrb[0].mxu0
        %v1718 = vpop.f32.mrb[0].mxu0
        %v1719 = vpop.f32.mrb[0].mxu0
        %1720 = vdwg.mxu0
        %v1721 = vmax.f32 %v1716, 0.0
        %v1722 = vpack.c.bf16 %v1721, %v1721
        %v1723 = vld [vmem:[%s11] sm:$0xf]
        %v1724 = vld [vmem:[%s11 + $0x4] sm:$0xf]
        %v1725 = vld [vmem:[%s11 + $0x8] sm:$0xf]
        %v1726 = vld [vmem:[%s11 + $0xc] sm:$0xf]
        %v1727 = vld [vmem:[%s11 + $0x10] sm:$0xf]
        %v1728 = vld [vmem:[%s11 + $0x14] sm:$0xf]
        %v1729 = vld [vmem:[%s11 + $0x18] sm:$0xf]
        %v1730 = vld [vmem:[%s11 + $0x1c] sm:$0xf]
        %v1731 = vld [vmem:[%s11 + $0x20] sm:$0xf]
        %v1732 = vld [vmem:[%s11 + $0x24] sm:$0xf]
        %v1733 = vld [vmem:[%s11 + $0x28] sm:$0xf]
        %v1734 = vld [vmem:[%s11 + $0x2c] sm:$0xf]
        %v1735 = vld [vmem:[%s11 + $0x30] sm:$0xf]
        %v1736 = vld [vmem:[%s11 + $0x34] sm:$0xf]
        %v1737 = vld [vmem:[%s11 + $0x38] sm:$0xf]
        %v1738 = vld [vmem:[%s11 + $0x3c] sm:$0xf]
        %v1739 = vld [vmem:[%s12] sm:$0x1]
        %v1741 = vlaneseq
        %v1742 = vshrl.u32 %v1741, 7
        %v1743 = vsub.s32 0, %v1742
        %v1744 = vrot.slane %v1739, %v1743
        %v1762 = vunpack.c.l.b16 %v1723
        %v1763 = vunpack.c.l.b16 %v1724
        %v1764 = vunpack.c.l.b16 %v1725
        %v1765 = vunpack.c.l.b16 %v1726
        %v1766 = vunpack.c.l.b16 %v1727
        %v1767 = vunpack.c.l.b16 %v1728
        %v1768 = vunpack.c.l.b16 %v1729
        %v1769 = vunpack.c.l.b16 %v1730
        %v1770 = vunpack.c.l.b16 %v1731
        %v1771 = vunpack.c.l.b16 %v1732
        %v1772 = vunpack.c.l.b16 %v1733
        %v1773 = vunpack.c.l.b16 %v1734
        %v1774 = vunpack.c.l.b16 %v1735
        %v1775 = vunpack.c.l.b16 %v1736
        %v1776 = vunpack.c.l.b16 %v1737
        %v1777 = vunpack.c.l.b16 %v1738
        %v1778 = vpack.c.b16 %v1763, %v1762
        %v1779 = vpack.c.b16 %v1765, %v1764
        %v1780 = vpack.c.b16 %v1767, %v1766
        %v1781 = vpack.c.b16 %v1769, %v1768
        %v1782 = vpack.c.b16 %v1771, %v1770
        %v1783 = vpack.c.b16 %v1773, %v1772
        %v1784 = vpack.c.b16 %v1775, %v1774
        %v1785 = vpack.c.b16 %v1777, %v1776
        %1794 = vmatprep.subr.bf16.mxu0 0
        %1795 = vmatpush1.bf16.msra.mxu0 %v1778
        %1796 = vmatprep.subr.bf16.mxu0 0
        %1797 = vmatpush1.bf16.msra.mxu0 %v1779
        %1798 = vmatprep.subr.bf16.mxu0 0
        %1799 = vmatpush1.bf16.msra.mxu0 %v1780
        %1800 = vmatprep.subr.bf16.mxu0 0
        %1801 = vmatpush1.bf16.msra.mxu0 %v1781
        %1802 = vmatprep.subr.bf16.mxu0 0
        %1803 = vmatpush1.bf16.msra.mxu0 %v1782
        %1804 = vmatprep.subr.bf16.mxu0 0
        %1805 = vmatpush1.bf16.msra.mxu0 %v1783
        %1806 = vmatprep.subr.bf16.mxu0 0
        %1807 = vmatpush1.bf16.msra.mxu0 %v1784
        %1808 = vmatprep.subr.bf16.mxu0 0
        %1809 = vmatpush1.bf16.msra.mxu0 %v1785
        %1810 = vmatprep.subr.bf16.mxu0 0
        %1811 = vmatpush1.bf16.msra.mxu0 0
        %1812 = vmatprep.subr.bf16.mxu0 0
        %1813 = vmatpush1.bf16.msra.mxu0 0
        %1814 = vmatprep.subr.bf16.mxu0 0
        %1815 = vmatpush1.bf16.msra.mxu0 0
        %1816 = vmatprep.subr.bf16.mxu0 0
        %1817 = vmatpush1.bf16.msra.mxu0 0
        %1818 = vmatprep.subr.bf16.mxu0 0
        %1819 = vmatpush1.bf16.msra.mxu0 0
        %1820 = vmatprep.subr.bf16.mxu0 0
        %1821 = vmatpush1.bf16.msra.mxu0 0
        %1822 = vmatprep.subr.bf16.mxu0 0
        %1823 = vmatpush1.bf16.msra.mxu0 0
        %1824 = vmatprep.subr.bf16.mxu0 0
        %1825 = vmatpush1.bf16.msra.mxu0 0
        %1826 = vmatprep.mubr.bf16.mxu0 0
        %1827 = vmatmul.mubr.bf16.gmra.mrb[0].mxu0 %v1722
        %v1828 = vpop.f32.mrb[0].mxu0
        %v1829 = vadd.f32 %v1744, %v1828
        %v1830 = vpop.f32.mrb[0].mxu0
        %v1831 = vpop.f32.mrb[0].mxu0
        %v1832 = vpop.f32.mrb[0].mxu0
        %1833 = vdwg.mxu0
        %v1834 = vadd.f32 %v1653, %v1829
        %v1835 = vsel %vm554, %v1834, 0.0
        %1836 = vadd.xlane.f32.xlu0 %v1835
        %v1837 = vpop.xlane.xlu0 %1836
        %v1838 = vmul.f32 %v1837, %v1627
        %v1839 = vsub.f32 %v1834, %v1838
        %v1840 = vmul.f32 %v1839, %v1839
        %v1841 = vsel %vm554, %v1840, 0.0
        %1842 = vadd.xlane.f32.xlu0 %v1841
        %v1843 = vpop.xlane.xlu0 %1842
        %v1844 = vmul.f32 %v1843, %v1627
        %v1845 = vadd.f32 %v1844, 1e-05
        %v1846 = vrsqrt.pop %v1845
        %v1847 = vmul.f32 %v1839, %v1846
        %v1848 = vld [vmem:[%s13] sm:$0x1]
        %v1850 = vlaneseq
        %v1851 = vshrl.u32 %v1850, 7
        %v1852 = vsub.s32 0, %v1851
        %v1853 = vrot.slane %v1848, %v1852
        %v1855 = vmul.f32 %v1847, %v1853
        %v1856 = vld [vmem:[%s14] sm:$0x1]
        %v1858 = vlaneseq
        %v1859 = vshrl.u32 %v1858, 7
        %v1860 = vsub.s32 0, %v1859
        %v1861 = vrot.slane %v1856, %v1860
        %v1863 = vadd.f32 %v1855, %v1861
        %1864 = vst.msk [vmem:[%s513] sm:$0xff] %vm554, %v1863
        %s1865 = sand.u32 %s359, 1
        %s1866 = scalar_lea.sflag [#allocation4], %s1865
        %s1867 = sand.u32 %s359, 1
        %s1868 = smul.addr %s1867, 8
        %s1869 = scalar_lea.vmem [#allocation3], %s1868
        %p1870 = scmp.lt.s32.totalorder %s31, 1
        %s1871 = scalar_select %p1870, %s31, 1
        %s1872 = smul.addr %s1871, 8
        %s1873 = scalar_lea.vmem %s16, %s1872
        // Predicated region
        $region81: #{tpu_custom_call.1} parent=79 // pred_check
          %p1874 = pneg %p369
        $region82: #{tpu_custom_call.1} parent=79 // pred_check_branch
          %1876 = sbr.rel (%p1874) target = $region84
        $region83: #{tpu_custom_call.1} parent=79 // pred_region
          %s1878 = ssub.s32 128, 128
          %1879 = vsyncadd %s1866, %s1878
          %s1880 = smul.addr %s31, 128
          %s1881 = scalar_lea.hbm %s15, %s1880
          %s1883 = sshll.u32 %s1869, 4
          %s1884 = int_to_ptr.vmem [resolvable:$true] %s1883
          %1886 = dma.vmem_to_hbm [thread:$0]  %s1884, 128, %s1881, %s1866
        $region84: #{tpu_custom_call.1} parent=79 // pred_fallthru
          _
        // Predicated region
        $region85: #{tpu_custom_call.1} parent=79 // pred_check
          %p1887 = pneg %p395
        $region86: #{tpu_custom_call.1} parent=79 // pred_check_branch
          %1889 = sbr.rel (%p1887) target = $region88
        $region87: #{tpu_custom_call.1} parent=79 // pred_region
          _
        $region88: #{tpu_custom_call.1} parent=79 // pred_fallthru
          _
      $region80: #{tpu_custom_call.1} parent=5 // pred_fallthru
        _
      %p1890 = scmp.le.s32.totalorder 2, %s26
      // Predicated region
      $region89: #{tpu_custom_call.1} parent=5 // pred_check
        %p1891 = pneg %p1890
      $region90: #{tpu_custom_call.1} parent=5 // pred_check_branch
        %1893 = sbr.rel (%p1891) target = $region92
      $region91: #{tpu_custom_call.1} parent=5 // pred_region
        %s1894 = ssub.s32 %s26, 2
        // Predicated region
        $region93: #{tpu_custom_call.1} parent=91 // pred_check
          %p1895 = pneg %p375
        $region94: #{tpu_custom_call.1} parent=91 // pred_check_branch
          %1897 = sbr.rel (%p1895) target = $region96
        $region95: #{tpu_custom_call.1} parent=91 // pred_region
          %s1898 = sand.u32 %s360, 1
          %s1899 = scalar_lea.sflag [#allocation4], %s1898
          %s1900 = sand.u32 %s360, 1
          %s1901 = smul.addr %s1900, 8
          %s1902 = scalar_lea.vmem [#allocation3], %s1901
          %1903 = dma.done %s1899, 128
        $region96: #{tpu_custom_call.1} parent=91 // pred_fallthru
          _
        // Predicated region
        $region97: #{tpu_custom_call.1} parent=91 // pred_check
          %p1904 = pneg %p401
        $region98: #{tpu_custom_call.1} parent=91 // pred_check_branch
          %1906 = sbr.rel (%p1904) target = $region100
        $region99: #{tpu_custom_call.1} parent=91 // pred_region
          %p1907 = scmp.lt.s32.totalorder %s32, 1
          %s1908 = scalar_select %p1907, %s32, 1
          %s1909 = smul.addr %s1908, 8
          %s1910 = scalar_lea.vmem %s16, %s1909
        $region100: #{tpu_custom_call.1} parent=91 // pred_fallthru
          _
      $region92: #{tpu_custom_call.1} parent=5 // pred_fallthru
        _
    $region6: #{tpu_custom_call.1} parent=1 // loop_footer
      %s30 = sadd.s32 1, %s26
    $region7: #{tpu_custom_call.1} parent=1 // loop_footer_branch
      %25 = sbr.rel target = $region3
    $region8: #{tpu_custom_call.1} parent=1 // loop_exit
      _
    %1911 = vsyncpa [#allocation4], 1
    %s1912 = scalar_lea.sflag [#allocation4], 1
    %1913 = vsyncpa %s1912, 1

</llo_original>
